<compile_context>
chip_gen: v7x
topology: tpu7x:2x2x1
jax: 0.10.0
libtpu: 0.0.40
codegen_flags: <defaults>
</compile_context>

<pallas_src>
import functools

import jax
import jax.numpy as jnp
from jax import lax
from jax.experimental import pallas as pl
from jax.experimental.pallas import tpu as pltpu


def _round_up(x, m):
    return (x + m - 1) // m * m


# ---------------------------------------------------------------------------
# Pallas kernel: out_T = relu(W @ cols_T + bias), one group block per grid step
# ---------------------------------------------------------------------------
def _gemm_bias_relu_kernel(w_ref, x_ref, b_ref, o_ref):
    # w_ref: (1, O, Kp)  x_ref: (1, Kp, tm)  b_ref: (1, O, 1)  o_ref: (1, O, tm)
    acc = jnp.dot(w_ref[0], x_ref[0], preferred_element_type=jnp.float32)
    acc = acc + b_ref[0]                       # (O, tm) + (O, 1), f32 epilogue
    o_ref[0] = jnp.maximum(acc, 0.0).astype(o_ref.dtype)


def _pick_m_tile(Mp, ng):
    """Largest M tile <= 1024 that divides Mp (Mp is a multiple of 128)."""
    tm = 128
    for cand in (1024, 512, 256):
        if Mp % cand == 0:
            tm = cand
            break
    # Prefer >= 2 total grid steps so both v7x TensorCores get work.
    if ng * (Mp // tm) < 2 and tm > 128:
        tm //= 2
    return tm


def grouped_conv_gemm(w, cols, bias):
    """w: (ng, O, Kp)  cols: (ng, Kp, Mp)  bias: (ng, O, 1) -> (ng, O, Mp) f32."""
    ng, O, Kp = w.shape
    Mp = cols.shape[2]
    tm = _pick_m_tile(Mp, ng)

    cost = pl.CostEstimate(
        flops=2 * ng * O * Kp * Mp,
        transcendentals=0,
        bytes_accessed=(w.size * w.dtype.itemsize
                        + cols.size * cols.dtype.itemsize
                        + bias.size * 4 + ng * O * Mp * 4))

    return pl.pallas_call(
        _gemm_bias_relu_kernel,
        out_shape=jax.ShapeDtypeStruct((ng, O, Mp), jnp.float32),
        grid_spec=pltpu.PrefetchScalarGridSpec(
            num_scalar_prefetch=0,
            grid=(ng, Mp // tm),
            in_specs=[
                pl.BlockSpec((1, O, Kp), lambda g, j: (g, 0, 0)),   # weights
                pl.BlockSpec((1, Kp, tm), lambda g, j: (g, 0, j)),  # cols_T
                pl.BlockSpec((1, O, 1), lambda g, j: (g, 0, 0)),    # bias
            ],
            out_specs=pl.BlockSpec((1, O, tm), lambda g, j: (g, 0, j)),
        ),
        compiler_params=pltpu.CompilerParams(
            dimension_semantics=("parallel", "parallel")),
        cost_estimate=cost,
    )(w, cols, bias)


# ---------------------------------------------------------------------------
# im2col in the transposed (K, M) layout; activations kept as (G, C, B, H, W)
# ---------------------------------------------------------------------------
def _im2col_T(h, kh, kw, stride, pad):
    """h: (G, C, B, H, W) -> (G, C*kh*kw, B*oh*ow).  K ordered (C, kh, kw) to
    match PyTorch's (O, C, kh, kw) weight flattening; M ordered (B, oh, ow)."""
    if pad:
        h = jnp.pad(h, ((0, 0), (0, 0), (0, 0), (pad, pad), (pad, pad)))
    G, C, B, H, W = h.shape
    oh = (H - kh) // stride + 1
    ow = (W - kw) // stride + 1
    patches = [h[:, :, :, i:i + stride * oh:stride, j:j + stride * ow:stride]
               for i in range(kh) for j in range(kw)]
    cols = jnp.stack(patches, 0).reshape(kh, kw, G, C, B, oh, ow)
    # Only major axes move; the minor (B, oh, ow) slab stays contiguous.
    cols = cols.transpose(2, 3, 0, 1, 4, 5, 6)        # (G, C, kh, kw, B, oh, ow)
    return cols.reshape(G, C * kh * kw, B * oh * ow), oh, ow


def conv4x4_s2_relu(h, w_packed, b_packed):
    """One 4x4 / stride-2 / pad-1 conv (+bias+ReLU) for all active groups.

    h: (ng, C, B, H, W) activations.  w_packed: (ng, O, Kp) with Kp = C*16
    rounded up to 128 (pre-padded at pack time).  b_packed: (ng, O, 1) f32.
    Returns (ng, O, B, oh, ow) float32 (channel-major, ready for next layer).
    """
    ng, C, B, H, W = h.shape
    h = h.astype(w_packed.dtype)                      # bf16 im2col / DMA traffic
    cols, oh, ow = _im2col_T(h, 4, 4, stride=2, pad=1)
    K = C * 16
    Kp = w_packed.shape[2]
    O = w_packed.shape[1]
    M = B * oh * ow
    Mp = _round_up(M, 128)
    cols = jnp.pad(cols, ((0, 0), (0, Kp - K), (0, Mp - M)))
    out = grouped_conv_gemm(w_packed, cols, b_packed)  # (ng, O, Mp) f32
    return out[:, :, :M].reshape(ng, O, B, oh, ow)


# ---------------------------------------------------------------------------
# Parameter packing (done once, outside the forward pass)
# ---------------------------------------------------------------------------
def pack_frac_params(params, *, num_latent, G, stage, compute_dtype=jnp.bfloat16):
    """Stack the weights of every active sub-encoder (i <= stage) along a
    leading group axis and pre-pad the conv GEMM weights to the lane-aligned
    (O, Kp) layout used by the Pallas kernel."""
    assert 0 <= stage < G
    K = num_latent // G
    n_act = stage + 1
    subs = params["subs"][:n_act]

    conv_layers = []
    for l in range(4):                                  # the 4 strided convs
        ws, bs = [], []
        for sp in subs:
            w, b = sp["convs"][l]                       # (O, C, 4, 4), (O,)
            O, C, kh, kw = w.shape
            Kt = C * kh * kw
            Kp = _round_up(Kt, 128)
            ws.append(jnp.pad(w.reshape(O, Kt), ((0, 0), (0, Kp - Kt))))
            bs.append(b)
        conv_layers.append((jnp.stack(ws, 0).astype(compute_dtype),
                            jnp.stack(bs, 0)[:, :, None].astype(jnp.float32)))

    w5 = jnp.stack([sp["convs"][4][0].reshape(sp["convs"][4][0].shape[0], -1)
                    for sp in subs], 0).astype(jnp.float32)       # (n_act, 64, 256)
    b5 = jnp.stack([sp["convs"][4][1] for sp in subs], 0).astype(jnp.float32)
    wl = jnp.stack([sp["linear"][0] for sp in subs], 0).astype(jnp.float32)
    bl = jnp.stack([sp["linear"][1] for sp in subs], 0).astype(jnp.float32)

    scale_rows, shift_rows = [], []
    for g in range(n_act):
        if g < stage:                                   # Projection applies
            w1, w2 = params["projs"][g]
            scale_rows.append(jnp.exp(w1.reshape(K)))
            shift_rows.append(w2.reshape(K))
        else:                                           # g == stage: identity
            scale_rows.append(jnp.ones((K,), jnp.float32))
            shift_rows.append(jnp.zeros((K,), jnp.float32))

    return {"conv": conv_layers, "conv5": (w5, b5), "linear": (wl, bl),
            "scale": jnp.stack(scale_rows, 0), "shift": jnp.stack(shift_rows, 0)}


# ---------------------------------------------------------------------------
# FracEncoder forward (packed params)
# ---------------------------------------------------------------------------
def frac_encoder_forward(packed, x, *, num_latent, G, stage):
    """x: (B, C, H, W) NCHW float32 -> (mu, logvar), each (B, num_latent)."""
    assert 0 <= stage < G
    K = num_latent // G
    n_act = stage + 1
    B = x.shape[0]

    # Group-major, channel-major activation layout: (n_act, C, B, H, W).
    xt = jnp.transpose(x, (1, 0, 2, 3))
    h = jnp.broadcast_to(xt[None], (n_act,) + xt.shape)

    # Convs 1-4: one Pallas grouped-GEMM launch per layer (all sub-encoders).
    for w_p, b_p in packed["conv"]:
        h = conv4x4_s2_relu(h, w_p, b_p)                # -> (n_act, 16, B, 4, 4)

    # conv5 (4x4 valid on 4x4 input) + Flatten + Linear: M == batch, left to XLA.
    w5, b5 = packed["conv5"]
    cols5 = jnp.transpose(h, (0, 1, 3, 4, 2)).reshape(n_act, -1, B)   # (n_act,256,B)
    h5 = jnp.maximum(jnp.einsum("gok,gkb->gob", w5, cols5) + b5[:, :, None], 0.0)
    wl, bl = packed["linear"]
    out = jnp.einsum("glk,gkb->glb", wl, h5) + bl[:, :, None]         # (n_act,2K,B)

    # Projection for groups < stage (identity for group == stage).
    mu_a = jnp.transpose(out[:, :K, :] * packed["scale"][:, :, None], (0, 2, 1))
    lv_a = jnp.transpose(out[:, K:, :] + packed["shift"][:, :, None], (0, 2, 1))

    # Groups > stage contribute zeros (matches torch.zeros_like branch).
    mu_all = jnp.zeros((G, B, K), jnp.float32).at[:n_act].set(mu_a)
    lv_all = jnp.zeros((G, B, K), jnp.float32).at[:n_act].set(lv_a)
    mu = jnp.transpose(mu_all, (1, 0, 2)).reshape(B, G * K)
    logvar = jnp.transpose(lv_all, (1, 0, 2)).reshape(B, G * K)
    return mu, logvar


# ---------------------------------------------------------------------------
# Deterministic parameter init (shapes from the PyTorch module __init__)
# ---------------------------------------------------------------------------
def init_conv_encoder_params(key, in_ch, num_latent, base_channel=8):
    chans = [in_ch, base_channel, base_channel, base_channel * 2,
             base_channel * 2, base_channel * 8]
    keys = jax.random.split(key, 12)
    convs = []
    for l in range(5):
        w = 0.05 * jax.random.normal(keys[2 * l],
                                     (chans[l + 1], chans[l], 4, 4), jnp.float32)
        b = 0.05 * jax.random.normal(keys[2 * l + 1], (chans[l + 1],), jnp.float32)
        convs.append((w, b))
    wl = 0.05 * jax.random.normal(keys[10], (num_latent * 2, base_channel * 8),
                                  jnp.float32)
    bl = 0.05 * jax.random.normal(keys[11], (num_latent * 2,), jnp.float32)
    return {"convs": convs, "linear": (wl, bl)}


def init_frac_encoder_params(key, in_ch, num_latent, G=5):
    assert num_latent % G == 0
    K = num_latent // G
    keys = jax.random.split(key, G)
    subs = [init_conv_encoder_params(keys[g], in_ch, K, base_channel=8)
            for g in range(G)]
    projs = [(jnp.zeros((1, K), jnp.float32), jnp.zeros((1, K), jnp.float32))
             for _ in range(G)]
    return {"subs": subs, "projs": projs}


# ---------------------------------------------------------------------------
# Plain-JAX f32 reference (mirrors the PyTorch module) for a sanity check
# ---------------------------------------------------------------------------
def _ref_conv_encoder(p, x, num_latent):
    h = x
    for idx, (w, b) in enumerate(p["convs"]):
        stride = (2, 2) if idx < 4 else (1, 1)
        pad = ((1, 1), (1, 1)) if idx < 4 else ((0, 0), (0, 0))
        h = lax.conv_general_dilated(h, w, window_strides=stride, padding=pad,
                                     dimension_numbers=("NCHW", "OIHW", "NCHW"))
        h = jnp.maximum(h + b[None, :, None, None], 0.0)
    flat = h.reshape(h.shape[0], -1)
    wl, bl = p["linear"]
    out = flat @ wl.T + bl
    return out[:, :num_latent], out[:, num_latent:]


def _ref_frac_forward(params, x, *, num_latent, G, stage):
    K = num_latent // G
    mus, logvars = [], []
    mu = logvar = None
    for i in range(G):
        if i <= stage:
            mu, logvar = _ref_conv_encoder(params["subs"][i], x, K)
            if i < stage:
                w1, w2 = params["projs"][i]
                mu = mu * jnp.exp(w1)
                logvar = logvar + w2
        else:
            mu = jnp.zeros_like(mu)
            logvar = jnp.zeros_like(logvar)
        mus.append(mu)
        logvars.append(logvar)
    return jnp.concatenate(mus, 1), jnp.concatenate(logvars, 1)


# ---------------------------------------------------------------------------
if __name__ == "__main__":
    B, C, H, W = 2, 3, 64, 64          # 64x64 required by Flatten->Linear(64, 2K)
    NUM_LATENT, G, STAGE = 10, 5, 0    # stage=0 is the module default

    key = jax.random.PRNGKey(0)
    k_param, k_x = jax.random.split(key)
    params = init_frac_encoder_params(k_param, C, NUM_LATENT, G)
    x = jax.random.normal(k_x, (B, C, H, W), jnp.float32)

    # Pack (reshape / pad / stack / bf16-cast) weights once, outside the forward.
    packed = pack_frac_params(params, num_latent=NUM_LATENT, G=G, stage=STAGE)

    fwd = jax.jit(functools.partial(frac_encoder_forward,
                                    num_latent=NUM_LATENT, G=G, stage=STAGE))
    mu, logvar = fwd(packed, x)
    mu, logvar = jax.block_until_ready((mu, logvar))

    assert mu.shape == (B, NUM_LATENT) and logvar.shape == (B, NUM_LATENT)
    assert mu.dtype == jnp.float32 and logvar.dtype == jnp.float32

    # Check against an independent f32 reference; loose tolerance covers the
    # bf16 MXU inputs (accumulation stays f32 in the kernel).
    mu_ref, lv_ref = _ref_frac_forward(params, x, num_latent=NUM_LATENT,
                                       G=G, stage=STAGE)
    assert jnp.allclose(mu, mu_ref, atol=2e-2, rtol=2e-2), \
        float(jnp.max(jnp.abs(mu - mu_ref)))
    assert jnp.allclose(logvar, lv_ref, atol=2e-2, rtol=2e-2), \
        float(jnp.max(jnp.abs(logvar - lv_ref)))

    print("KERNEL_OK")
</pallas_src>

<mosaic_0001>
module attributes {stable_mosaic.version = 11 : i64} {
  func.func @_gemm_bias_relu_kernel(%arg0: i32, %arg1: i32, %arg2: memref<1x8x128xbf16, #tpu.memory_space<vmem>>, %arg3: memref<1x128x1024xbf16, #tpu.memory_space<vmem>>, %arg4: memref<1x8x1xf32, #tpu.memory_space<vmem>>, %arg5: memref<1x8x1024xf32, #tpu.memory_space<vmem>>) attributes {dimension_semantics = [#tpu.dimension_semantics<parallel>, #tpu.dimension_semantics<parallel>], iteration_bounds = array<i64: 1, 2>, scalar_prefetch = 0 : i64, scratch_operands = 0 : i64, tpu.core_type = #tpu.core_type<tc>, window_params = [{transform_indices = @transform_0, window_bounds = array<i64: 1, 8, 128>}, {transform_indices = @transform_1, window_bounds = array<i64: 1, 128, 1024>}, {transform_indices = @transform_2, window_bounds = array<i64: 1, 8, 1>}, {transform_indices = @transform_3, window_bounds = array<i64: 1, 8, 1024>}]} {
    %c0 = arith.constant 0 : index
    %c0_0 = arith.constant 0 : index
    %c0_1 = arith.constant 0 : index
    %0 = vector.load %arg2[%c0, %c0_0, %c0_1] : memref<1x8x128xbf16, #tpu.memory_space<vmem>>, vector<1x8x128xbf16>
    %1 = vector.shape_cast %0 : vector<1x8x128xbf16> to vector<8x128xbf16>
    %c0_2 = arith.constant 0 : index
    %c0_3 = arith.constant 0 : index
    %c0_4 = arith.constant 0 : index
    %2 = vector.load %arg3[%c0_2, %c0_3, %c0_4] : memref<1x128x1024xbf16, #tpu.memory_space<vmem>>, vector<1x128x1024xbf16>
    %3 = vector.shape_cast %2 : vector<1x128x1024xbf16> to vector<128x1024xbf16>
    %cst = arith.constant dense<0.000000e+00> : vector<8x1024xf32>
    %4 = tpu.matmul %1, %3, %cst {dimension_numbers = #tpu.dot_dimension_numbers<[1], [0], [0], [1], [0, 0, 1, 1], [], []>} : vector<8x128xbf16>, vector<128x1024xbf16>, vector<8x1024xf32> -> vector<8x1024xf32>
    %c0_5 = arith.constant 0 : index
    %c0_6 = arith.constant 0 : index
    %c0_7 = arith.constant 0 : index
    %5 = vector.load %arg4[%c0_5, %c0_6, %c0_7] : memref<1x8x1xf32, #tpu.memory_space<vmem>>, vector<1x8x1xf32>
    %6 = vector.shape_cast %5 : vector<1x8x1xf32> to vector<8x1xf32>
    %7 = vector.broadcast %6 : vector<8x1xf32> to vector<8x1024xf32>
    %8 = arith.addf %4, %7 : vector<8x1024xf32>
    %cst_8 = arith.constant 0.000000e+00 : f32
    %9 = vector.broadcast %cst_8 : f32 to vector<8x1024xf32>
    %10 = arith.maximumf %8, %9 : vector<8x1024xf32>
    %c0_9 = arith.constant 0 : index
    %c0_10 = arith.constant 0 : index
    %c0_11 = arith.constant 0 : index
    %11 = vector.load %arg5[%c0_9, %c0_10, %c0_11] : memref<1x8x1024xf32, #tpu.memory_space<vmem>>, vector<1x8x1024xf32>
    %12 = vector.shape_cast %11 : vector<1x8x1024xf32> to vector<8x1024xf32>
    %13 = vector.shape_cast %10 : vector<8x1024xf32> to vector<1x8x1024xf32>
    tpu.vector_store %arg5[%c0_9, %c0_10, %c0_11], %13 {strides = array<i32>} : memref<1x8x1024xf32, #tpu.memory_space<vmem>>, vector<1x8x1024xf32>,
    return
  }
  func.func @transform_0(%arg0: i32, %arg1: i32) -> (i32, i32, i32) {
    %c0_i32 = arith.constant 0 : i32
    %c0_i32_0 = arith.constant 0 : i32
    %c0_i32_1 = arith.constant 0 : i32
    return %arg0, %c0_i32, %c0_i32_0 : i32, i32, i32
  }
  func.func @transform_1(%arg0: i32, %arg1: i32) -> (i32, i32, i32) {
    %c0_i32 = arith.constant 0 : i32
    %c0_i32_0 = arith.constant 0 : i32
    return %arg0, %c0_i32, %arg1 : i32, i32, i32
  }
  func.func @transform_2(%arg0: i32, %arg1: i32) -> (i32, i32, i32) {
    %c0_i32 = arith.constant 0 : i32
    %c0_i32_0 = arith.constant 0 : i32
    %c0_i32_1 = arith.constant 0 : i32
    return %arg0, %c0_i32, %c0_i32_0 : i32, i32, i32
  }
  func.func @transform_3(%arg0: i32, %arg1: i32) -> (i32, i32, i32) {
    %c0_i32 = arith.constant 0 : i32
    %c0_i32_0 = arith.constant 0 : i32
    return %arg0, %c0_i32, %arg1 : i32, i32, i32
  }
}

module attributes {stable_mosaic.version = 11 : i64} {
  func.func @_gemm_bias_relu_kernel(%arg0: i32, %arg1: i32, %arg2: memref<1x8x128xbf16, #tpu.memory_space<vmem>>, %arg3: memref<1x128x256xbf16, #tpu.memory_space<vmem>>, %arg4: memref<1x8x1xf32, #tpu.memory_space<vmem>>, %arg5: memref<1x8x256xf32, #tpu.memory_space<vmem>>) attributes {dimension_semantics = [#tpu.dimension_semantics<parallel>, #tpu.dimension_semantics<parallel>], iteration_bounds = array<i64: 1, 2>, scalar_prefetch = 0 : i64, scratch_operands = 0 : i64, tpu.core_type = #tpu.core_type<tc>, window_params = [{transform_indices = @transform_0, window_bounds = array<i64: 1, 8, 128>}, {transform_indices = @transform_1, window_bounds = array<i64: 1, 128, 256>}, {transform_indices = @transform_2, window_bounds = array<i64: 1, 8, 1>}, {transform_indices = @transform_3, window_bounds = array<i64: 1, 8, 256>}]} {
    %c0 = arith.constant 0 : index
    %c0_0 = arith.constant 0 : index
    %c0_1 = arith.constant 0 : index
    %0 = vector.load %arg2[%c0, %c0_0, %c0_1] : memref<1x8x128xbf16, #tpu.memory_space<vmem>>, vector<1x8x128xbf16>
    %1 = vector.shape_cast %0 : vector<1x8x128xbf16> to vector<8x128xbf16>
    %c0_2 = arith.constant 0 : index
    %c0_3 = arith.constant 0 : index
    %c0_4 = arith.constant 0 : index
    %2 = vector.load %arg3[%c0_2, %c0_3, %c0_4] : memref<1x128x256xbf16, #tpu.memory_space<vmem>>, vector<1x128x256xbf16>
    %3 = vector.shape_cast %2 : vector<1x128x256xbf16> to vector<128x256xbf16>
    %cst = arith.constant dense<0.000000e+00> : vector<8x256xf32>
    %4 = tpu.matmul %1, %3, %cst {dimension_numbers = #tpu.dot_dimension_numbers<[1], [0], [0], [1], [0, 0, 1, 1], [], []>} : vector<8x128xbf16>, vector<128x256xbf16>, vector<8x256xf32> -> vector<8x256xf32>
    %c0_5 = arith.constant 0 : index
    %c0_6 = arith.constant 0 : index
    %c0_7 = arith.constant 0 : index
    %5 = vector.load %arg4[%c0_5, %c0_6, %c0_7] : memref<1x8x1xf32, #tpu.memory_space<vmem>>, vector<1x8x1xf32>
    %6 = vector.shape_cast %5 : vector<1x8x1xf32> to vector<8x1xf32>
    %7 = vector.broadcast %6 : vector<8x1xf32> to vector<8x256xf32>
    %8 = arith.addf %4, %7 : vector<8x256xf32>
    %cst_8 = arith.constant 0.000000e+00 : f32
    %9 = vector.broadcast %cst_8 : f32 to vector<8x256xf32>
    %10 = arith.maximumf %8, %9 : vector<8x256xf32>
    %c0_9 = arith.constant 0 : index
    %c0_10 = arith.constant 0 : index
    %c0_11 = arith.constant 0 : index
    %11 = vector.load %arg5[%c0_9, %c0_10, %c0_11] : memref<1x8x256xf32, #tpu.memory_space<vmem>>, vector<1x8x256xf32>
    %12 = vector.shape_cast %11 : vector<1x8x256xf32> to vector<8x256xf32>
    %13 = vector.shape_cast %10 : vector<8x256xf32> to vector<1x8x256xf32>
    tpu.vector_store %arg5[%c0_9, %c0_10, %c0_11], %13 {strides = array<i32>} : memref<1x8x256xf32, #tpu.memory_space<vmem>>, vector<1x8x256xf32>,
    return
  }
  func.func @transform_0(%arg0: i32, %arg1: i32) -> (i32, i32, i32) {
    %c0_i32 = arith.constant 0 : i32
    %c0_i32_0 = arith.constant 0 : i32
    %c0_i32_1 = arith.constant 0 : i32
    return %arg0, %c0_i32, %c0_i32_0 : i32, i32, i32
  }
  func.func @transform_1(%arg0: i32, %arg1: i32) -> (i32, i32, i32) {
    %c0_i32 = arith.constant 0 : i32
    %c0_i32_0 = arith.constant 0 : i32
    return %arg0, %c0_i32, %arg1 : i32, i32, i32
  }
  func.func @transform_2(%arg0: i32, %arg1: i32) -> (i32, i32, i32) {
    %c0_i32 = arith.constant 0 : i32
    %c0_i32_0 = arith.constant 0 : i32
    %c0_i32_1 = arith.constant 0 : i32
    return %arg0, %c0_i32, %c0_i32_0 : i32, i32, i32
  }
  func.func @transform_3(%arg0: i32, %arg1: i32) -> (i32, i32, i32) {
    %c0_i32 = arith.constant 0 : i32
    %c0_i32_0 = arith.constant 0 : i32
    return %arg0, %c0_i32, %arg1 : i32, i32, i32
  }
}

module attributes {stable_mosaic.version = 11 : i64} {
  func.func @_gemm_bias_relu_kernel(%arg0: i32, %arg1: i32, %arg2: memref<1x16x128xbf16, #tpu.memory_space<vmem>>, %arg3: memref<1x128x128xbf16, #tpu.memory_space<vmem>>, %arg4: memref<1x16x1xf32, #tpu.memory_space<vmem>>, %arg5: memref<1x16x128xf32, #tpu.memory_space<vmem>>) attributes {dimension_semantics = [#tpu.dimension_semantics<parallel>, #tpu.dimension_semantics<parallel>], iteration_bounds = array<i64: 1, 1>, scalar_prefetch = 0 : i64, scratch_operands = 0 : i64, tpu.core_type = #tpu.core_type<tc>, window_params = [{transform_indices = @transform_0, window_bounds = array<i64: 1, 16, 128>}, {transform_indices = @transform_1, window_bounds = array<i64: 1, 128, 128>}, {transform_indices = @transform_2, window_bounds = array<i64: 1, 16, 1>}, {transform_indices = @transform_3, window_bounds = array<i64: 1, 16, 128>}]} {
    %c0 = arith.constant 0 : index
    %c0_0 = arith.constant 0 : index
    %c0_1 = arith.constant 0 : index
    %0 = vector.load %arg2[%c0, %c0_0, %c0_1] : memref<1x16x128xbf16, #tpu.memory_space<vmem>>, vector<1x16x128xbf16>
    %1 = vector.shape_cast %0 : vector<1x16x128xbf16> to vector<16x128xbf16>
    %c0_2 = arith.constant 0 : index
    %c0_3 = arith.constant 0 : index
    %c0_4 = arith.constant 0 : index
    %2 = vector.load %arg3[%c0_2, %c0_3, %c0_4] : memref<1x128x128xbf16, #tpu.memory_space<vmem>>, vector<1x128x128xbf16>
    %3 = vector.shape_cast %2 : vector<1x128x128xbf16> to vector<128x128xbf16>
    %cst = arith.constant dense<0.000000e+00> : vector<16x128xf32>
    %4 = tpu.matmul %1, %3, %cst {dimension_numbers = #tpu.dot_dimension_numbers<[1], [0], [0], [1], [0, 0, 1, 1], [], []>} : vector<16x128xbf16>, vector<128x128xbf16>, vector<16x128xf32> -> vector<16x128xf32>
    %c0_5 = arith.constant 0 : index
    %c0_6 = arith.constant 0 : index
    %c0_7 = arith.constant 0 : index
    %5 = vector.load %arg4[%c0_5, %c0_6, %c0_7] : memref<1x16x1xf32, #tpu.memory_space<vmem>>, vector<1x16x1xf32>
    %6 = vector.shape_cast %5 : vector<1x16x1xf32> to vector<16x1xf32>
    %7 = vector.broadcast %6 : vector<16x1xf32> to vector<16x128xf32>
    %8 = arith.addf %4, %7 : vector<16x128xf32>
    %cst_8 = arith.constant 0.000000e+00 : f32
    %9 = vector.broadcast %cst_8 : f32 to vector<16x128xf32>
    %10 = arith.maximumf %8, %9 : vector<16x128xf32>
    %c0_9 = arith.constant 0 : index
    %c0_10 = arith.constant 0 : index
    %c0_11 = arith.constant 0 : index
    %11 = vector.load %arg5[%c0_9, %c0_10, %c0_11] : memref<1x16x128xf32, #tpu.memory_space<vmem>>, vector<1x16x128xf32>
    %12 = vector.shape_cast %11 : vector<1x16x128xf32> to vector<16x128xf32>
    %13 = vector.shape_cast %10 : vector<16x128xf32> to vector<1x16x128xf32>
    tpu.vector_store %arg5[%c0_9, %c0_10, %c0_11], %13 {strides = array<i32>} : memref<1x16x128xf32, #tpu.memory_space<vmem>>, vector<1x16x128xf32>,
    return
  }
  func.func @transform_0(%arg0: i32, %arg1: i32) -> (i32, i32, i32) {
    %c0_i32 = arith.constant 0 : i32
    %c0_i32_0 = arith.constant 0 : i32
    %c0_i32_1 = arith.constant 0 : i32
    return %arg0, %c0_i32, %c0_i32_0 : i32, i32, i32
  }
  func.func @transform_1(%arg0: i32, %arg1: i32) -> (i32, i32, i32) {
    %c0_i32 = arith.constant 0 : i32
    %c0_i32_0 = arith.constant 0 : i32
    return %arg0, %c0_i32, %arg1 : i32, i32, i32
  }
  func.func @transform_2(%arg0: i32, %arg1: i32) -> (i32, i32, i32) {
    %c0_i32 = arith.constant 0 : i32
    %c0_i32_0 = arith.constant 0 : i32
    %c0_i32_1 = arith.constant 0 : i32
    return %arg0, %c0_i32, %c0_i32_0 : i32, i32, i32
  }
  func.func @transform_3(%arg0: i32, %arg1: i32) -> (i32, i32, i32) {
    %c0_i32 = arith.constant 0 : i32
    %c0_i32_0 = arith.constant 0 : i32
    return %arg0, %c0_i32, %arg1 : i32, i32, i32
  }
}

module attributes {stable_mosaic.version = 11 : i64} {
  func.func @_gemm_bias_relu_kernel(%arg0: i32, %arg1: i32, %arg2: memref<1x16x256xbf16, #tpu.memory_space<vmem>>, %arg3: memref<1x256x128xbf16, #tpu.memory_space<vmem>>, %arg4: memref<1x16x1xf32, #tpu.memory_space<vmem>>, %arg5: memref<1x16x128xf32, #tpu.memory_space<vmem>>) attributes {dimension_semantics = [#tpu.dimension_semantics<parallel>, #tpu.dimension_semantics<parallel>], iteration_bounds = array<i64: 1, 1>, scalar_prefetch = 0 : i64, scratch_operands = 0 : i64, tpu.core_type = #tpu.core_type<tc>, window_params = [{transform_indices = @transform_0, window_bounds = array<i64: 1, 16, 256>}, {transform_indices = @transform_1, window_bounds = array<i64: 1, 256, 128>}, {transform_indices = @transform_2, window_bounds = array<i64: 1, 16, 1>}, {transform_indices = @transform_3, window_bounds = array<i64: 1, 16, 128>}]} {
    %c0 = arith.constant 0 : index
    %c0_0 = arith.constant 0 : index
    %c0_1 = arith.constant 0 : index
    %0 = vector.load %arg2[%c0, %c0_0, %c0_1] : memref<1x16x256xbf16, #tpu.memory_space<vmem>>, vector<1x16x256xbf16>
    %1 = vector.shape_cast %0 : vector<1x16x256xbf16> to vector<16x256xbf16>
    %c0_2 = arith.constant 0 : index
    %c0_3 = arith.constant 0 : index
    %c0_4 = arith.constant 0 : index
    %2 = vector.load %arg3[%c0_2, %c0_3, %c0_4] : memref<1x256x128xbf16, #tpu.memory_space<vmem>>, vector<1x256x128xbf16>
    %3 = vector.shape_cast %2 : vector<1x256x128xbf16> to vector<256x128xbf16>
    %cst = arith.constant dense<0.000000e+00> : vector<16x128xf32>
    %4 = tpu.matmul %1, %3, %cst {dimension_numbers = #tpu.dot_dimension_numbers<[1], [0], [0], [1], [0, 0, 1, 1], [], []>} : vector<16x256xbf16>, vector<256x128xbf16>, vector<16x128xf32> -> vector<16x128xf32>
    %c0_5 = arith.constant 0 : index
    %c0_6 = arith.constant 0 : index
    %c0_7 = arith.constant 0 : index
    %5 = vector.load %arg4[%c0_5, %c0_6, %c0_7] : memref<1x16x1xf32, #tpu.memory_space<vmem>>, vector<1x16x1xf32>
    %6 = vector.shape_cast %5 : vector<1x16x1xf32> to vector<16x1xf32>
    %7 = vector.broadcast %6 : vector<16x1xf32> to vector<16x128xf32>
    %8 = arith.addf %4, %7 : vector<16x128xf32>
    %cst_8 = arith.constant 0.000000e+00 : f32
    %9 = vector.broadcast %cst_8 : f32 to vector<16x128xf32>
    %10 = arith.maximumf %8, %9 : vector<16x128xf32>
    %c0_9 = arith.constant 0 : index
    %c0_10 = arith.constant 0 : index
    %c0_11 = arith.constant 0 : index
    %11 = vector.load %arg5[%c0_9, %c0_10, %c0_11] : memref<1x16x128xf32, #tpu.memory_space<vmem>>, vector<1x16x128xf32>
    %12 = vector.shape_cast %11 : vector<1x16x128xf32> to vector<16x128xf32>
    %13 = vector.shape_cast %10 : vector<16x128xf32> to vector<1x16x128xf32>
    tpu.vector_store %arg5[%c0_9, %c0_10, %c0_11], %13 {strides = array<i32>} : memref<1x16x128xf32, #tpu.memory_space<vmem>>, vector<1x16x128xf32>,
    return
  }
  func.func @transform_0(%arg0: i32, %arg1: i32) -> (i32, i32, i32) {
    %c0_i32 = arith.constant 0 : i32
    %c0_i32_0 = arith.constant 0 : i32
    %c0_i32_1 = arith.constant 0 : i32
    return %arg0, %c0_i32, %c0_i32_0 : i32, i32, i32
  }
  func.func @transform_1(%arg0: i32, %arg1: i32) -> (i32, i32, i32) {
    %c0_i32 = arith.constant 0 : i32
    %c0_i32_0 = arith.constant 0 : i32
    return %arg0, %c0_i32, %arg1 : i32, i32, i32
  }
  func.func @transform_2(%arg0: i32, %arg1: i32) -> (i32, i32, i32) {
    %c0_i32 = arith.constant 0 : i32
    %c0_i32_0 = arith.constant 0 : i32
    %c0_i32_1 = arith.constant 0 : i32
    return %arg0, %c0_i32, %c0_i32_0 : i32, i32, i32
  }
  func.func @transform_3(%arg0: i32, %arg1: i32) -> (i32, i32, i32) {
    %c0_i32 = arith.constant 0 : i32
    %c0_i32_0 = arith.constant 0 : i32
    return %arg0, %c0_i32, %arg1 : i32, i32, i32
  }
}

</mosaic_0001>

<llo_original>
// kernel: frac_encoder_forward.4
$region0: #{frac_encoder_forward.4}
  #allocation0 [shape = 'u32[]', space=smem, size = 0x4, offset = 0x4, fixed_abs, tag = 'smem constant byte address 0x4 - core index']
  #allocation1 [shape = 'u32[144,128]{1,0:T(1,128)}', space=vmem, size = 0x12000, scoped, tag = 'internal scratch']
  %s0 = inlined_call_operand.vmem [shape: bf16[1,8,128], index: 0, kind: input, shape index: {}]
  %s1 = inlined_call_operand.vmem [shape: bf16[1,128,2048], index: 1, kind: input, shape index: {}]
  %s2 = inlined_call_operand.vmem [shape: f32[1,8,1], index: 2, kind: input, shape index: {}]
  %s3 = inlined_call_operand.vmem [shape: f32[1,8,2048], index: 3, kind: output, shape index: {}]
  %s4 = sld [smem:[#allocation0]]
  $region68: #{frac_encoder_forward.4} parent=0
    _
  %s6 = ssub.s32 1, %s4
  %s7 = scalar_select 0, %s6, %s4
  $region1: #{frac_encoder_forward.4} parent=0
    #allocation2 [shape = 'u8[524288]{0}', space=vmem, size = 0x80000, scoped, tag = 'input window, operand 1']
    loop: start=0, step=1, limit=4
    $region2: #{frac_encoder_forward.4} parent=1 // loop_pre_header
      _
    $region3: #{frac_encoder_forward.4} parent=1 // loop_header
      %s9 = sphi 0, %s13
      %p10 = scmp.ge.s32.totalorder %s9, 4
      %s16 = sphi 0, %s28
      %s17 = sphi 0, %s24
      %s18 = sphi 0, %s16
      %s19 = sphi 0, %s17
      %s20 = sphi 0, %s18
      %s21 = sphi 0, %s19
      %s31 = sphi 0, %s33
      %s34 = sphi 0, %s31
      %s35 = sphi 0, %s34
      %s51 = sphi 0, %s35
      %s59 = sphi 0, %s61
      %s62 = sphi 0, %s59
      %s63 = sphi 0, %s62
      %s79 = sphi 0, %s63
      %s85 = sphi 0, %s87
      %s88 = sphi 0, %s85
      %s89 = sphi 0, %s88
      %s105 = sphi 0, %s89
      %s113 = sphi 0, %s115
      %s116 = sphi 0, %s113
      %s117 = sphi 0, %s116
      %s133 = sphi 0, %s117
    $region4: #{frac_encoder_forward.4} parent=1 // loop_header_branch
      %12 = sbr.rel (%p10) target = $region8
    $region5: #{frac_encoder_forward.4} parent=1 // loop_body
      %s14 = ssub.s32 %s9, 1
      %s15 = ssub.s32 %s9, 2
      %s22 = sadd.s32 1, %s17
      %p23 = scmp.ge.s32.totalorder %s22, 2
      %s24 = scalar_select %p23, 0, %s22
      %s25 = sadd.s32 1, %s16
      %s26 = scalar_select %p23, %s25, %s16
      %p27 = scmp.ge.s32.totalorder %s26, 1
      %s28 = scalar_select %p27, 0, %s26
      %s29 = ssub.s32 %s16, %s28
      %p30 = scmp.eq.s32.totalorder %s29, 0
      %s32 = sadd.s32 %s31, 1
      %s33 = scalar_select %p30, %s31, %s32
      %p36 = pneg %p30
      %p37 = scmp.eq.s32.totalorder %s9, 1
      %p38 = por %p36, %p37
      %p39 = scmp.ne.s32.totalorder %s31, %s34
      %p40 = scmp.eq.s32.totalorder %s9, 0
      %p41 = por %p39, %p40
      %p42 = scmp.ne.s32.totalorder %s31, %s34
      %p43 = scmp.eq.s32.totalorder %s14, 1
      %p44 = por %p42, %p43
      %p45 = scmp.ne.s32.totalorder %s34, %s35
      %p46 = scmp.eq.s32.totalorder %s14, 0
      %p47 = por %p45, %p46
      %p48 = scmp.ne.s32.totalorder %s34, %s35
      %p49 = scmp.eq.s32.totalorder %s15, 1
      %p50 = por %p48, %p49
      %p52 = scmp.ne.s32.totalorder %s35, %s51
      %p53 = scmp.eq.s32.totalorder %s15, 0
      %p54 = por %p52, %p53
      %s55 = ssub.s32 %s16, %s28
      %s56 = ssub.s32 %s17, %s24
      %s57 = sor.u32 %s55, %s56
      %p58 = scmp.eq.s32.totalorder %s57, 0
      %s60 = sadd.s32 %s59, 1
      %s61 = scalar_select %p58, %s59, %s60
      %p64 = pneg %p58
      %p65 = scmp.eq.s32.totalorder %s9, 1
      %p66 = por %p64, %p65
      %p67 = scmp.ne.s32.totalorder %s59, %s62
      %p68 = scmp.eq.s32.totalorder %s9, 0
      %p69 = por %p67, %p68
      %p70 = scmp.ne.s32.totalorder %s59, %s62
      %p71 = scmp.eq.s32.totalorder %s14, 1
      %p72 = por %p70, %p71
      %p73 = scmp.ne.s32.totalorder %s62, %s63
      %p74 = scmp.eq.s32.totalorder %s14, 0
      %p75 = por %p73, %p74
      %p76 = scmp.ne.s32.totalorder %s62, %s63
      %p77 = scmp.eq.s32.totalorder %s15, 1
      %p78 = por %p76, %p77
      %p80 = scmp.ne.s32.totalorder %s63, %s79
      %p81 = scmp.eq.s32.totalorder %s15, 0
      %p82 = por %p80, %p81
      %s83 = ssub.s32 %s16, %s28
      %p84 = scmp.eq.s32.totalorder %s83, 0
      %s86 = sadd.s32 %s85, 1
      %s87 = scalar_select %p84, %s85, %s86
      %p90 = pneg %p84
      %p91 = scmp.eq.s32.totalorder %s9, 1
      %p92 = por %p90, %p91
      %p93 = scmp.ne.s32.totalorder %s85, %s88
      %p94 = scmp.eq.s32.totalorder %s9, 0
      %p95 = por %p93, %p94
      %p96 = scmp.ne.s32.totalorder %s85, %s88
      %p97 = scmp.eq.s32.totalorder %s14, 1
      %p98 = por %p96, %p97
      %p99 = scmp.ne.s32.totalorder %s88, %s89
      %p100 = scmp.eq.s32.totalorder %s14, 0
      %p101 = por %p99, %p100
      %p102 = scmp.ne.s32.totalorder %s88, %s89
      %p103 = scmp.eq.s32.totalorder %s15, 1
      %p104 = por %p102, %p103
      %p106 = scmp.ne.s32.totalorder %s89, %s105
      %p107 = scmp.eq.s32.totalorder %s15, 0
      %p108 = por %p106, %p107
      %s109 = ssub.s32 %s16, %s28
      %s110 = ssub.s32 %s17, %s24
      %s111 = sor.u32 %s109, %s110
      %p112 = scmp.eq.s32.totalorder %s111, 0
      %s114 = sadd.s32 %s113, 1
      %s115 = scalar_select %p112, %s113, %s114
      %p118 = pneg %p112
      %p119 = scmp.eq.s32.totalorder %s9, 1
      %p120 = por %p118, %p119
      %p121 = scmp.ne.s32.totalorder %s113, %s116
      %p122 = scmp.eq.s32.totalorder %s9, 0
      %p123 = por %p121, %p122
      %p124 = scmp.ne.s32.totalorder %s113, %s116
      %p125 = scmp.eq.s32.totalorder %s14, 1
      %p126 = por %p124, %p125
      %p127 = scmp.ne.s32.totalorder %s116, %s117
      %p128 = scmp.eq.s32.totalorder %s14, 0
      %p129 = por %p127, %p128
      %p130 = scmp.ne.s32.totalorder %s116, %s117
      %p131 = scmp.eq.s32.totalorder %s15, 1
      %p132 = por %p130, %p131
      %p134 = scmp.ne.s32.totalorder %s117, %s133
      %p135 = scmp.eq.s32.totalorder %s15, 0
      %p136 = por %p134, %p135
      %p137 = scmp.le.s32.totalorder 1, %s9
      %p138 = scmp.lt.s32.totalorder %s9, 3
      %p139 = pnand %p137, %p138
      %p140 = pneg %p139
      // Predicated region
      $region9: #{frac_encoder_forward.4} parent=5 // pred_check
        _
      $region10: #{frac_encoder_forward.4} parent=5 // pred_check_branch
        %142 = sbr.rel (%p139) target = $region12
      $region11: #{frac_encoder_forward.4} parent=5 // pred_region
        %s143 = ssub.s32 %s9, 1
        // Predicated region
        $region13: #{frac_encoder_forward.4} parent=11 // pred_check
          %p144 = pneg %p47
        $region14: #{frac_encoder_forward.4} parent=11 // pred_check_branch
          %146 = sbr.rel (%p144) target = $region16
        $region15: #{frac_encoder_forward.4} parent=11 // pred_region
          %p147 = scmp.lt.s32.totalorder %s18, 0
          %s148 = scalar_select %p147, %s18, 0
          %s149 = smul.addr %s148, 4
          %s150 = scalar_lea.vmem %s0, %s149
        $region16: #{frac_encoder_forward.4} parent=11 // pred_fallthru
          _
        // Predicated region
        $region17: #{frac_encoder_forward.4} parent=11 // pred_check
          %p151 = pneg %p101
        $region18: #{frac_encoder_forward.4} parent=11 // pred_check_branch
          %153 = sbr.rel (%p151) target = $region20
        $region19: #{frac_encoder_forward.4} parent=11 // pred_region
          %p154 = scmp.lt.s32.totalorder %s18, 0
          %s155 = scalar_select %p154, %s18, 0
          %s156 = smul.addr %s155, 8
          %s157 = scalar_lea.vmem %s2, %s156
        $region20: #{frac_encoder_forward.4} parent=11 // pred_fallthru
          _
      $region12: #{frac_encoder_forward.4} parent=5 // pred_fallthru
        _
      %p158 = scmp.lt.s32.totalorder %s9, 2
      // Predicated region
      $region21: #{frac_encoder_forward.4} parent=5 // pred_check
        %p159 = pneg %p158
      $region22: #{frac_encoder_forward.4} parent=5 // pred_check_branch
        %161 = sbr.rel (%p159) target = $region24
      $region23: #{frac_encoder_forward.4} parent=5 // pred_region
        // Predicated region
        $region25: #{frac_encoder_forward.4} parent=23 // pred_check
          %p162 = pneg %p69
        $region26: #{frac_encoder_forward.4} parent=23 // pred_check_branch
          %164 = sbr.rel (%p162) target = $region28
        $region27: #{frac_encoder_forward.4} parent=23 // pred_region
          %s165 = sand.u32 %s59, 1
          %s166 = sand.u32 %s59, 1
          %s167 = smul.addr %s166, 512
          %s168 = scalar_lea.vmem [#allocation2], %s167
          %s169 = smul.u32 8, %s17
          %s170 = smul.addr %s16, 256
          %s171 = sadd.s32 %s169, %s170
          %s172 = smul.addr %s171, 4
          %s173 = scalar_lea.vmem %s1, %s172
          // Predicated region
          $region29: #{frac_encoder_forward.4} parent=27 // pred_check
            _
          $region30: #{frac_encoder_forward.4} parent=27 // pred_check_branch
            %175 = sbr.rel (0) target = $region32
          $region31: #{frac_encoder_forward.4} parent=27 // pred_region
            // Predicated region
            $region33: #{frac_encoder_forward.4} parent=31 // pred_check
              _
            $region34: #{frac_encoder_forward.4} parent=31 // pred_check_branch
              %177 = sbr.rel (0) target = $region36
            $region35: #{frac_encoder_forward.4} parent=31 // pred_region
              loop: start=0, step=1, limit=1
              $region37: #{frac_encoder_forward.4} parent=35 // loop_pre_header
                _
              $region38: #{frac_encoder_forward.4} parent=35 // loop_header
                %s179 = sphi 0, %s183
                %p180 = scmp.ge.s32.totalorder %s179, 1
                %s184 = sphi %s173, %s173
                %s185 = sphi %s168, %s168
              $region39: #{frac_encoder_forward.4} parent=35 // loop_header_branch
                %182 = sbr.rel (%p180) target = $region43
              $region40: #{frac_encoder_forward.4} parent=35 // loop_body
                %v186 = vld [vmem:[%s184] sm:$0xff]
                %187 = vst [vmem:[%s185] sm:$0xff] %v186
                %v188 = vld [vmem:[%s184 + $0x8] sm:$0xff]
                %189 = vst [vmem:[%s185 + $0x8] sm:$0xff] %v188
                %v190 = vld [vmem:[%s184 + $0x10] sm:$0xff]
                %191 = vst [vmem:[%s185 + $0x10] sm:$0xff] %v190
                %v192 = vld [vmem:[%s184 + $0x18] sm:$0xff]
                %193 = vst [vmem:[%s185 + $0x18] sm:$0xff] %v192
                %v194 = vld [vmem:[%s184 + $0x40] sm:$0xff]
                %195 = vst [vmem:[%s185 + $0x20] sm:$0xff] %v194
                %v196 = vld [vmem:[%s184 + $0x48] sm:$0xff]
                %197 = vst [vmem:[%s185 + $0x28] sm:$0xff] %v196
                %v198 = vld [vmem:[%s184 + $0x50] sm:$0xff]
                %199 = vst [vmem:[%s185 + $0x30] sm:$0xff] %v198
                %v200 = vld [vmem:[%s184 + $0x58] sm:$0xff]
                %201 = vst [vmem:[%s185 + $0x38] sm:$0xff] %v200
                %v202 = vld [vmem:[%s184 + $0x80] sm:$0xff]
                %203 = vst [vmem:[%s185 + $0x40] sm:$0xff] %v202
                %v204 = vld [vmem:[%s184 + $0x88] sm:$0xff]
                %205 = vst [vmem:[%s185 + $0x48] sm:$0xff] %v204
                %v206 = vld [vmem:[%s184 + $0x90] sm:$0xff]
                %207 = vst [vmem:[%s185 + $0x50] sm:$0xff] %v206
                %v208 = vld [vmem:[%s184 + $0x98] sm:$0xff]
                %209 = vst [vmem:[%s185 + $0x58] sm:$0xff] %v208
                %v210 = vld [vmem:[%s184 + $0xc0] sm:$0xff]
                %211 = vst [vmem:[%s185 + $0x60] sm:$0xff] %v210
                %v212 = vld [vmem:[%s184 + $0xc8] sm:$0xff]
                %213 = vst [vmem:[%s185 + $0x68] sm:$0xff] %v212
                %v214 = vld [vmem:[%s184 + $0xd0] sm:$0xff]
                %215 = vst [vmem:[%s185 + $0x70] sm:$0xff] %v214
                %v216 = vld [vmem:[%s184 + $0xd8] sm:$0xff]
                %217 = vst [vmem:[%s185 + $0x78] sm:$0xff] %v216
                %v218 = vld [vmem:[%s184 + $0x100] sm:$0xff]
                %219 = vst [vmem:[%s185 + $0x80] sm:$0xff] %v218
                %v220 = vld [vmem:[%s184 + $0x108] sm:$0xff]
                %221 = vst [vmem:[%s185 + $0x88] sm:$0xff] %v220
                %v222 = vld [vmem:[%s184 + $0x110] sm:$0xff]
                %223 = vst [vmem:[%s185 + $0x90] sm:$0xff] %v222
                %v224 = vld [vmem:[%s184 + $0x118] sm:$0xff]
                %225 = vst [vmem:[%s185 + $0x98] sm:$0xff] %v224
                %v226 = vld [vmem:[%s184 + $0x140] sm:$0xff]
                %227 = vst [vmem:[%s185 + $0xa0] sm:$0xff] %v226
                %v228 = vld [vmem:[%s184 + $0x148] sm:$0xff]
                %229 = vst [vmem:[%s185 + $0xa8] sm:$0xff] %v228
                %v230 = vld [vmem:[%s184 + $0x150] sm:$0xff]
                %231 = vst [vmem:[%s185 + $0xb0] sm:$0xff] %v230
                %v232 = vld [vmem:[%s184 + $0x158] sm:$0xff]
                %233 = vst [vmem:[%s185 + $0xb8] sm:$0xff] %v232
                %v234 = vld [vmem:[%s184 + $0x180] sm:$0xff]
                %235 = vst [vmem:[%s185 + $0xc0] sm:$0xff] %v234
                %v236 = vld [vmem:[%s184 + $0x188] sm:$0xff]
                %237 = vst [vmem:[%s185 + $0xc8] sm:$0xff] %v236
                %v238 = vld [vmem:[%s184 + $0x190] sm:$0xff]
                %239 = vst [vmem:[%s185 + $0xd0] sm:$0xff] %v238
                %v240 = vld [vmem:[%s184 + $0x198] sm:$0xff]
                %241 = vst [vmem:[%s185 + $0xd8] sm:$0xff] %v240
                %v242 = vld [vmem:[%s184 + $0x1c0] sm:$0xff]
                %243 = vst [vmem:[%s185 + $0xe0] sm:$0xff] %v242
                %v244 = vld [vmem:[%s184 + $0x1c8] sm:$0xff]
                %245 = vst [vmem:[%s185 + $0xe8] sm:$0xff] %v244
                %v246 = vld [vmem:[%s184 + $0x1d0] sm:$0xff]
                %247 = vst [vmem:[%s185 + $0xf0] sm:$0xff] %v246
                %v248 = vld [vmem:[%s184 + $0x1d8] sm:$0xff]
                %249 = vst [vmem:[%s185 + $0xf8] sm:$0xff] %v248
                %v250 = vld [vmem:[%s184 + $0x200] sm:$0xff]
                %251 = vst [vmem:[%s185 + $0x100] sm:$0xff] %v250
                %v252 = vld [vmem:[%s184 + $0x208] sm:$0xff]
                %253 = vst [vmem:[%s185 + $0x108] sm:$0xff] %v252
                %v254 = vld [vmem:[%s184 + $0x210] sm:$0xff]
                %255 = vst [vmem:[%s185 + $0x110] sm:$0xff] %v254
                %v256 = vld [vmem:[%s184 + $0x218] sm:$0xff]
                %257 = vst [vmem:[%s185 + $0x118] sm:$0xff] %v256
                %v258 = vld [vmem:[%s184 + $0x240] sm:$0xff]
                %259 = vst [vmem:[%s185 + $0x120] sm:$0xff] %v258
                %v260 = vld [vmem:[%s184 + $0x248] sm:$0xff]
                %261 = vst [vmem:[%s185 + $0x128] sm:$0xff] %v260
                %v262 = vld [vmem:[%s184 + $0x250] sm:$0xff]
                %263 = vst [vmem:[%s185 + $0x130] sm:$0xff] %v262
                %v264 = vld [vmem:[%s184 + $0x258] sm:$0xff]
                %265 = vst [vmem:[%s185 + $0x138] sm:$0xff] %v264
                %v266 = vld [vmem:[%s184 + $0x280] sm:$0xff]
                %267 = vst [vmem:[%s185 + $0x140] sm:$0xff] %v266
                %v268 = vld [vmem:[%s184 + $0x288] sm:$0xff]
                %269 = vst [vmem:[%s185 + $0x148] sm:$0xff] %v268
                %v270 = vld [vmem:[%s184 + $0x290] sm:$0xff]
                %271 = vst [vmem:[%s185 + $0x150] sm:$0xff] %v270
                %v272 = vld [vmem:[%s184 + $0x298] sm:$0xff]
                %273 = vst [vmem:[%s185 + $0x158] sm:$0xff] %v272
                %v274 = vld [vmem:[%s184 + $0x2c0] sm:$0xff]
                %275 = vst [vmem:[%s185 + $0x160] sm:$0xff] %v274
                %v276 = vld [vmem:[%s184 + $0x2c8] sm:$0xff]
                %277 = vst [vmem:[%s185 + $0x168] sm:$0xff] %v276
                %v278 = vld [vmem:[%s184 + $0x2d0] sm:$0xff]
                %279 = vst [vmem:[%s185 + $0x170] sm:$0xff] %v278
                %v280 = vld [vmem:[%s184 + $0x2d8] sm:$0xff]
                %281 = vst [vmem:[%s185 + $0x178] sm:$0xff] %v280
                %v282 = vld [vmem:[%s184 + $0x300] sm:$0xff]
                %283 = vst [vmem:[%s185 + $0x180] sm:$0xff] %v282
                %v284 = vld [vmem:[%s184 + $0x308] sm:$0xff]
                %285 = vst [vmem:[%s185 + $0x188] sm:$0xff] %v284
                %v286 = vld [vmem:[%s184 + $0x310] sm:$0xff]
                %287 = vst [vmem:[%s185 + $0x190] sm:$0xff] %v286
                %v288 = vld [vmem:[%s184 + $0x318] sm:$0xff]
                %289 = vst [vmem:[%s185 + $0x198] sm:$0xff] %v288
                %v290 = vld [vmem:[%s184 + $0x340] sm:$0xff]
                %291 = vst [vmem:[%s185 + $0x1a0] sm:$0xff] %v290
                %v292 = vld [vmem:[%s184 + $0x348] sm:$0xff]
                %293 = vst [vmem:[%s185 + $0x1a8] sm:$0xff] %v292
                %v294 = vld [vmem:[%s184 + $0x350] sm:$0xff]
                %295 = vst [vmem:[%s185 + $0x1b0] sm:$0xff] %v294
                %v296 = vld [vmem:[%s184 + $0x358] sm:$0xff]
                %297 = vst [vmem:[%s185 + $0x1b8] sm:$0xff] %v296
                %v298 = vld [vmem:[%s184 + $0x380] sm:$0xff]
                %299 = vst [vmem:[%s185 + $0x1c0] sm:$0xff] %v298
                %v300 = vld [vmem:[%s184 + $0x388] sm:$0xff]
                %301 = vst [vmem:[%s185 + $0x1c8] sm:$0xff] %v300
                %v302 = vld [vmem:[%s184 + $0x390] sm:$0xff]
                %303 = vst [vmem:[%s185 + $0x1d0] sm:$0xff] %v302
                %v304 = vld [vmem:[%s184 + $0x398] sm:$0xff]
                %305 = vst [vmem:[%s185 + $0x1d8] sm:$0xff] %v304
                %v306 = vld [vmem:[%s184 + $0x3c0] sm:$0xff]
                %307 = vst [vmem:[%s185 + $0x1e0] sm:$0xff] %v306
                %v308 = vld [vmem:[%s184 + $0x3c8] sm:$0xff]
                %309 = vst [vmem:[%s185 + $0x1e8] sm:$0xff] %v308
                %v310 = vld [vmem:[%s184 + $0x3d0] sm:$0xff]
                %311 = vst [vmem:[%s185 + $0x1f0] sm:$0xff] %v310
                %v312 = vld [vmem:[%s184 + $0x3d8] sm:$0xff]
                %313 = vst [vmem:[%s185 + $0x1f8] sm:$0xff] %v312
              $region41: #{frac_encoder_forward.4} parent=35 // loop_footer
                %s183 = sadd.s32 1, %s179
              $region42: #{frac_encoder_forward.4} parent=35 // loop_footer_branch
                %178 = sbr.rel target = $region38
              $region43: #{frac_encoder_forward.4} parent=35 // loop_exit
                _
            $region36: #{frac_encoder_forward.4} parent=31 // pred_fallthru
              _
            // Predicated region
            $region44: #{frac_encoder_forward.4} parent=31 // pred_check
              _
            $region45: #{frac_encoder_forward.4} parent=31 // pred_check_branch
              %315 = sbr.rel target = $region47
            $region46: #{frac_encoder_forward.4} parent=31 // pred_region
              _
            $region47: #{frac_encoder_forward.4} parent=31 // pred_fallthru
              _
          $region32: #{frac_encoder_forward.4} parent=27 // pred_fallthru
            _
          %316 = vnop
        $region28: #{frac_encoder_forward.4} parent=23 // pred_fallthru
          _
      $region24: #{frac_encoder_forward.4} parent=5 // pred_fallthru
        _
      %p317 = scmp.le.s32.totalorder 1, %s9
      %p318 = scmp.lt.s32.totalorder %s9, 3
      %p319 = pnand %p317, %p318
      %p320 = pneg %p319
      // Predicated region
      $region48: #{frac_encoder_forward.4} parent=5 // pred_check
        _
      $region49: #{frac_encoder_forward.4} parent=5 // pred_check_branch
        %322 = sbr.rel (%p319) target = $region51
      $region50: #{frac_encoder_forward.4} parent=5 // pred_region
        %s323 = ssub.s32 %s9, 1
        %s324 = sand.u32 %s62, 1
        %s325 = sand.u32 %s62, 1
        %s326 = smul.addr %s325, 512
        %s327 = scalar_lea.vmem [#allocation2], %s326
        // Predicated region
        $region52: #{frac_encoder_forward.4} parent=50 // pred_check
          %p328 = pneg %p75
        $region53: #{frac_encoder_forward.4} parent=50 // pred_check_branch
          %330 = sbr.rel (%p328) target = $region55
        $region54: #{frac_encoder_forward.4} parent=50 // pred_region
          _
        $region55: #{frac_encoder_forward.4} parent=50 // pred_fallthru
          _
        %p331 = scmp.lt.s32.totalorder %s18, 0
        %s332 = scalar_select %p331, %s18, 0
        %s333 = smul.addr %s332, 4
        %s334 = scalar_lea.vmem %s0, %s333
        %p335 = pneg %p47
        %p336 = pneg %p44
        %s337 = sand.u32 %s62, 1
        %s338 = sand.u32 %s62, 1
        %s339 = smul.addr %s338, 512
        %s340 = scalar_lea.vmem [#allocation2], %s339
        %p341 = pneg %p75
        %p342 = pneg %p72
        %p343 = scmp.lt.s32.totalorder %s18, 0
        %s344 = scalar_select %p343, %s18, 0
        %s345 = smul.addr %s344, 8
        %s346 = scalar_lea.vmem %s2, %s345
        %p347 = pneg %p101
        %p348 = pneg %p98
        %p349 = pneg %p129
        %p350 = pneg %p126
        %s351 = smul.u32 8, %s19
        %p352 = scmp.lt.s32.totalorder %s18, 0
        %s353 = scalar_select %p352, %s18, 0
        %p354 = scmp.lt.s32.totalorder %s351, 15
        %s355 = scalar_select %p354, %s351, 15
        %s356 = smul.addr %s353, 16
        %s357 = sadd.s32 %s355, %s356
        %s358 = smul.addr %s357, 8
        %s359 = scalar_lea.vmem %s3, %s358
        %p360 = scmp.lt.s32.totalorder %s18, 0
        %s361 = scalar_select %p360, %s18, 0
        %s362 = smul.addr %s361, 4
        %s363 = scalar_lea.vmem %s0, %s362
        %s364 = smul.u32 8, %s19
        %p365 = scmp.lt.s32.totalorder %s18, 0
        %s366 = scalar_select %p365, %s18, 0
        %s367 = smul.addr %s366, 8
        %s368 = scalar_lea.vmem %s2, %s367
        %s369 = smul.u32 8, %s19
        %p370 = scmp.lt.s32.totalorder %s18, 0
        %s371 = scalar_select %p370, %s18, 0
        %p372 = scmp.lt.s32.totalorder %s369, 15
        %s373 = scalar_select %p372, %s369, 15
        %s374 = smul.addr %s371, 16
        %s375 = sadd.s32 %s373, %s374
        %s376 = smul.addr %s375, 8
        %s377 = scalar_lea.vmem %s3, %s376
        %s378 = smul.u32 8, %s19
        %v380 = vld [vmem:[%s363] sm:$0xf]
        %v381 = vld [vmem:[%s327] sm:$0xff]
        %v382 = vld [vmem:[%s327 + $0x8] sm:$0xff]
        %v383 = vld [vmem:[%s327 + $0x10] sm:$0xff]
        %v384 = vld [vmem:[%s327 + $0x18] sm:$0xff]
        %v385 = vld [vmem:[%s327 + $0x20] sm:$0xff]
        %v386 = vld [vmem:[%s327 + $0x28] sm:$0xff]
        %v387 = vld [vmem:[%s327 + $0x30] sm:$0xff]
        %v388 = vld [vmem:[%s327 + $0x38] sm:$0xff]
        %v389 = vld [vmem:[%s327 + $0x40] sm:$0xff]
        %v390 = vld [vmem:[%s327 + $0x48] sm:$0xff]
        %v391 = vld [vmem:[%s327 + $0x50] sm:$0xff]
        %v392 = vld [vmem:[%s327 + $0x58] sm:$0xff]
        %v393 = vld [vmem:[%s327 + $0x60] sm:$0xff]
        %v394 = vld [vmem:[%s327 + $0x68] sm:$0xff]
        %v395 = vld [vmem:[%s327 + $0x70] sm:$0xff]
        %v396 = vld [vmem:[%s327 + $0x78] sm:$0xff]
        %v397 = vld [vmem:[%s327 + $0x80] sm:$0xff]
        %v398 = vld [vmem:[%s327 + $0x88] sm:$0xff]
        %v399 = vld [vmem:[%s327 + $0x90] sm:$0xff]
        %v400 = vld [vmem:[%s327 + $0x98] sm:$0xff]
        %v401 = vld [vmem:[%s327 + $0xa0] sm:$0xff]
        %v402 = vld [vmem:[%s327 + $0xa8] sm:$0xff]
        %v403 = vld [vmem:[%s327 + $0xb0] sm:$0xff]
        %v404 = vld [vmem:[%s327 + $0xb8] sm:$0xff]
        %v405 = vld [vmem:[%s327 + $0xc0] sm:$0xff]
        %v406 = vld [vmem:[%s327 + $0xc8] sm:$0xff]
        %v407 = vld [vmem:[%s327 + $0xd0] sm:$0xff]
        %v408 = vld [vmem:[%s327 + $0xd8] sm:$0xff]
        %v409 = vld [vmem:[%s327 + $0xe0] sm:$0xff]
        %v410 = vld [vmem:[%s327 + $0xe8] sm:$0xff]
        %v411 = vld [vmem:[%s327 + $0xf0] sm:$0xff]
        %v412 = vld [vmem:[%s327 + $0xf8] sm:$0xff]
        %v413 = vld [vmem:[%s327 + $0x100] sm:$0xff]
        %v414 = vld [vmem:[%s327 + $0x108] sm:$0xff]
        %v415 = vld [vmem:[%s327 + $0x110] sm:$0xff]
        %v416 = vld [vmem:[%s327 + $0x118] sm:$0xff]
        %v417 = vld [vmem:[%s327 + $0x120] sm:$0xff]
        %v418 = vld [vmem:[%s327 + $0x128] sm:$0xff]
        %v419 = vld [vmem:[%s327 + $0x130] sm:$0xff]
        %v420 = vld [vmem:[%s327 + $0x138] sm:$0xff]
        %v421 = vld [vmem:[%s327 + $0x140] sm:$0xff]
        %v422 = vld [vmem:[%s327 + $0x148] sm:$0xff]
        %v423 = vld [vmem:[%s327 + $0x150] sm:$0xff]
        %v424 = vld [vmem:[%s327 + $0x158] sm:$0xff]
        %v425 = vld [vmem:[%s327 + $0x160] sm:$0xff]
        %v426 = vld [vmem:[%s327 + $0x168] sm:$0xff]
        %v427 = vld [vmem:[%s327 + $0x170] sm:$0xff]
        %v428 = vld [vmem:[%s327 + $0x178] sm:$0xff]
        %v429 = vld [vmem:[%s327 + $0x180] sm:$0xff]
        %v430 = vld [vmem:[%s327 + $0x188] sm:$0xff]
        %v431 = vld [vmem:[%s327 + $0x190] sm:$0xff]
        %v432 = vld [vmem:[%s327 + $0x198] sm:$0xff]
        %v433 = vld [vmem:[%s327 + $0x1a0] sm:$0xff]
        %v434 = vld [vmem:[%s327 + $0x1a8] sm:$0xff]
        %v435 = vld [vmem:[%s327 + $0x1b0] sm:$0xff]
        %v436 = vld [vmem:[%s327 + $0x1b8] sm:$0xff]
        %v437 = vld [vmem:[%s327 + $0x1c0] sm:$0xff]
        %v438 = vld [vmem:[%s327 + $0x1c8] sm:$0xff]
        %v439 = vld [vmem:[%s327 + $0x1d0] sm:$0xff]
        %v440 = vld [vmem:[%s327 + $0x1d8] sm:$0xff]
        %v441 = vld [vmem:[%s327 + $0x1e0] sm:$0xff]
        %v442 = vld [vmem:[%s327 + $0x1e8] sm:$0xff]
        %v443 = vld [vmem:[%s327 + $0x1f0] sm:$0xff]
        %v444 = vld [vmem:[%s327 + $0x1f8] sm:$0xff]
        %v445 = vld [vmem:[%s368] sm:$0xff]
        %447 = vset.pattern.permute.xlu0 0
        %448 = vperm.xlu0 %447, %v445
        %v449 = vpop.permute.xlu0 %448
        %v515 = vunpack.c.l.b16 %v381
        %v516 = vunpack.c.h.b16 %v381
        %v517 = vunpack.c.l.b16 %v382
        %v518 = vunpack.c.h.b16 %v382
        %v519 = vunpack.c.l.b16 %v383
        %v520 = vunpack.c.h.b16 %v383
        %v521 = vunpack.c.l.b16 %v384
        %v522 = vunpack.c.h.b16 %v384
        %v523 = vunpack.c.l.b16 %v385
        %v524 = vunpack.c.h.b16 %v385
        %v525 = vunpack.c.l.b16 %v386
        %v526 = vunpack.c.h.b16 %v386
        %v527 = vunpack.c.l.b16 %v387
        %v528 = vunpack.c.h.b16 %v387
        %v529 = vunpack.c.l.b16 %v388
        %v530 = vunpack.c.h.b16 %v388
        %v531 = vunpack.c.l.b16 %v389
        %v532 = vunpack.c.h.b16 %v389
        %v533 = vunpack.c.l.b16 %v390
        %v534 = vunpack.c.h.b16 %v390
        %v535 = vunpack.c.l.b16 %v391
        %v536 = vunpack.c.h.b16 %v391
        %v537 = vunpack.c.l.b16 %v392
        %v538 = vunpack.c.h.b16 %v392
        %v539 = vunpack.c.l.b16 %v393
        %v540 = vunpack.c.h.b16 %v393
        %v541 = vunpack.c.l.b16 %v394
        %v542 = vunpack.c.h.b16 %v394
        %v543 = vunpack.c.l.b16 %v395
        %v544 = vunpack.c.h.b16 %v395
        %v545 = vunpack.c.l.b16 %v396
        %v546 = vunpack.c.h.b16 %v396
        %v547 = vunpack.c.l.b16 %v397
        %v548 = vunpack.c.h.b16 %v397
        %v549 = vunpack.c.l.b16 %v398
        %v550 = vunpack.c.h.b16 %v398
        %v551 = vunpack.c.l.b16 %v399
        %v552 = vunpack.c.h.b16 %v399
        %v553 = vunpack.c.l.b16 %v400
        %v554 = vunpack.c.h.b16 %v400
        %v555 = vunpack.c.l.b16 %v401
        %v556 = vunpack.c.h.b16 %v401
        %v557 = vunpack.c.l.b16 %v402
        %v558 = vunpack.c.h.b16 %v402
        %v559 = vunpack.c.l.b16 %v403
        %v560 = vunpack.c.h.b16 %v403
        %v561 = vunpack.c.l.b16 %v404
        %v562 = vunpack.c.h.b16 %v404
        %v563 = vunpack.c.l.b16 %v405
        %v564 = vunpack.c.h.b16 %v405
        %v565 = vunpack.c.l.b16 %v406
        %v566 = vunpack.c.h.b16 %v406
        %v567 = vunpack.c.l.b16 %v407
        %v568 = vunpack.c.h.b16 %v407
        %v569 = vunpack.c.l.b16 %v408
        %v570 = vunpack.c.h.b16 %v408
        %v571 = vunpack.c.l.b16 %v409
        %v572 = vunpack.c.h.b16 %v409
        %v573 = vunpack.c.l.b16 %v410
        %v574 = vunpack.c.h.b16 %v410
        %v575 = vunpack.c.l.b16 %v411
        %v576 = vunpack.c.h.b16 %v411
        %v577 = vunpack.c.l.b16 %v412
        %v578 = vunpack.c.h.b16 %v412
        %v579 = vunpack.c.l.b16 %v413
        %v580 = vunpack.c.h.b16 %v413
        %v581 = vunpack.c.l.b16 %v414
        %v582 = vunpack.c.h.b16 %v414
        %v583 = vunpack.c.l.b16 %v415
        %v584 = vunpack.c.h.b16 %v415
        %v585 = vunpack.c.l.b16 %v416
        %v586 = vunpack.c.h.b16 %v416
        %v587 = vunpack.c.l.b16 %v417
        %v588 = vunpack.c.h.b16 %v417
        %v589 = vunpack.c.l.b16 %v418
        %v590 = vunpack.c.h.b16 %v418
        %v591 = vunpack.c.l.b16 %v419
        %v592 = vunpack.c.h.b16 %v419
        %v593 = vunpack.c.l.b16 %v420
        %v594 = vunpack.c.h.b16 %v420
        %v595 = vunpack.c.l.b16 %v421
        %v596 = vunpack.c.h.b16 %v421
        %v597 = vunpack.c.l.b16 %v422
        %v598 = vunpack.c.h.b16 %v422
        %v599 = vunpack.c.l.b16 %v423
        %v600 = vunpack.c.h.b16 %v423
        %v601 = vunpack.c.l.b16 %v424
        %v602 = vunpack.c.h.b16 %v424
        %v603 = vunpack.c.l.b16 %v425
        %v604 = vunpack.c.h.b16 %v425
        %v605 = vunpack.c.l.b16 %v426
        %v606 = vunpack.c.h.b16 %v426
        %v607 = vunpack.c.l.b16 %v427
        %v608 = vunpack.c.h.b16 %v427
        %v609 = vunpack.c.l.b16 %v428
        %v610 = vunpack.c.h.b16 %v428
        %v611 = vunpack.c.l.b16 %v429
        %v612 = vunpack.c.h.b16 %v429
        %v613 = vunpack.c.l.b16 %v430
        %v614 = vunpack.c.h.b16 %v430
        %v615 = vunpack.c.l.b16 %v431
        %v616 = vunpack.c.h.b16 %v431
        %v617 = vunpack.c.l.b16 %v432
        %v618 = vunpack.c.h.b16 %v432
        %v619 = vunpack.c.l.b16 %v433
        %v620 = vunpack.c.h.b16 %v433
        %v621 = vunpack.c.l.b16 %v434
        %v622 = vunpack.c.h.b16 %v434
        %v623 = vunpack.c.l.b16 %v435
        %v624 = vunpack.c.h.b16 %v435
        %v625 = vunpack.c.l.b16 %v436
        %v626 = vunpack.c.h.b16 %v436
        %v627 = vunpack.c.l.b16 %v437
        %v628 = vunpack.c.h.b16 %v437
        %v629 = vunpack.c.l.b16 %v438
        %v630 = vunpack.c.h.b16 %v438
        %v631 = vunpack.c.l.b16 %v439
        %v632 = vunpack.c.h.b16 %v439
        %v633 = vunpack.c.l.b16 %v440
        %v634 = vunpack.c.h.b16 %v440
        %v635 = vunpack.c.l.b16 %v441
        %v636 = vunpack.c.h.b16 %v441
        %v637 = vunpack.c.l.b16 %v442
        %v638 = vunpack.c.h.b16 %v442
        %v639 = vunpack.c.l.b16 %v443
        %v640 = vunpack.c.h.b16 %v443
        %v641 = vunpack.c.l.b16 %v444
        %v642 = vunpack.c.h.b16 %v444
        %v643 = vpack.c.b16 %v523, %v515
        %v644 = vpack.c.b16 %v524, %v516
        %v645 = vpack.c.b16 %v525, %v517
        %v646 = vpack.c.b16 %v526, %v518
        %v647 = vpack.c.b16 %v527, %v519
        %v648 = vpack.c.b16 %v528, %v520
        %v649 = vpack.c.b16 %v529, %v521
        %v650 = vpack.c.b16 %v530, %v522
        %v651 = vpack.c.b16 %v539, %v531
        %v652 = vpack.c.b16 %v540, %v532
        %v653 = vpack.c.b16 %v541, %v533
        %v654 = vpack.c.b16 %v542, %v534
        %v655 = vpack.c.b16 %v543, %v535
        %v656 = vpack.c.b16 %v544, %v536
        %v657 = vpack.c.b16 %v545, %v537
        %v658 = vpack.c.b16 %v546, %v538
        %v659 = vpack.c.b16 %v555, %v547
        %v660 = vpack.c.b16 %v556, %v548
        %v661 = vpack.c.b16 %v557, %v549
        %v662 = vpack.c.b16 %v558, %v550
        %v663 = vpack.c.b16 %v559, %v551
        %v664 = vpack.c.b16 %v560, %v552
        %v665 = vpack.c.b16 %v561, %v553
        %v666 = vpack.c.b16 %v562, %v554
        %v667 = vpack.c.b16 %v571, %v563
        %v668 = vpack.c.b16 %v572, %v564
        %v669 = vpack.c.b16 %v573, %v565
        %v670 = vpack.c.b16 %v574, %v566
        %v671 = vpack.c.b16 %v575, %v567
        %v672 = vpack.c.b16 %v576, %v568
        %v673 = vpack.c.b16 %v577, %v569
        %v674 = vpack.c.b16 %v578, %v570
        %v675 = vpack.c.b16 %v587, %v579
        %v676 = vpack.c.b16 %v588, %v580
        %v677 = vpack.c.b16 %v589, %v581
        %v678 = vpack.c.b16 %v590, %v582
        %v679 = vpack.c.b16 %v591, %v583
        %v680 = vpack.c.b16 %v592, %v584
        %v681 = vpack.c.b16 %v593, %v585
        %v682 = vpack.c.b16 %v594, %v586
        %v683 = vpack.c.b16 %v603, %v595
        %v684 = vpack.c.b16 %v604, %v596
        %v685 = vpack.c.b16 %v605, %v597
        %v686 = vpack.c.b16 %v606, %v598
        %v687 = vpack.c.b16 %v607, %v599
        %v688 = vpack.c.b16 %v608, %v600
        %v689 = vpack.c.b16 %v609, %v601
        %v690 = vpack.c.b16 %v610, %v602
        %v691 = vpack.c.b16 %v619, %v611
        %v692 = vpack.c.b16 %v620, %v612
        %v693 = vpack.c.b16 %v621, %v613
        %v694 = vpack.c.b16 %v622, %v614
        %v695 = vpack.c.b16 %v623, %v615
        %v696 = vpack.c.b16 %v624, %v616
        %v697 = vpack.c.b16 %v625, %v617
        %v698 = vpack.c.b16 %v626, %v618
        %v699 = vpack.c.b16 %v635, %v627
        %v700 = vpack.c.b16 %v636, %v628
        %v701 = vpack.c.b16 %v637, %v629
        %v702 = vpack.c.b16 %v638, %v630
        %v703 = vpack.c.b16 %v639, %v631
        %v704 = vpack.c.b16 %v640, %v632
        %v705 = vpack.c.b16 %v641, %v633
        %v706 = vpack.c.b16 %v642, %v634
        %771 = vmatprep.subr.bf16.mxu0 %v644
        %772 = vmatpush1.bf16.msra.mxu0 %v643
        %773 = vmatprep.subr.bf16.mxu0 %v652
        %774 = vmatpush1.bf16.msra.mxu0 %v651
        %775 = vmatprep.subr.bf16.mxu0 %v660
        %776 = vmatpush1.bf16.msra.mxu0 %v659
        %777 = vmatprep.subr.bf16.mxu0 %v668
        %778 = vmatpush1.bf16.msra.mxu0 %v667
        %779 = vmatprep.subr.bf16.mxu0 %v676
        %780 = vmatpush1.bf16.msra.mxu0 %v675
        %781 = vmatprep.subr.bf16.mxu0 %v684
        %782 = vmatpush1.bf16.msra.mxu0 %v683
        %783 = vmatprep.subr.bf16.mxu0 %v692
        %784 = vmatpush1.bf16.msra.mxu0 %v691
        %785 = vmatprep.subr.bf16.mxu0 %v700
        %786 = vmatpush1.bf16.msra.mxu0 %v699
        %787 = vmatprep.subr.bf16.mxu0 0
        %788 = vmatpush1.bf16.msra.mxu0 0
        %789 = vmatprep.subr.bf16.mxu0 0
        %790 = vmatpush1.bf16.msra.mxu0 0
        %791 = vmatprep.subr.bf16.mxu0 0
        %792 = vmatpush1.bf16.msra.mxu0 0
        %793 = vmatprep.subr.bf16.mxu0 0
        %794 = vmatpush1.bf16.msra.mxu0 0
        %795 = vmatprep.subr.bf16.mxu0 0
        %796 = vmatpush1.bf16.msra.mxu0 0
        %797 = vmatprep.subr.bf16.mxu0 0
        %798 = vmatpush1.bf16.msra.mxu0 0
        %799 = vmatprep.subr.bf16.mxu0 0
        %800 = vmatpush1.bf16.msra.mxu0 0
        %801 = vmatprep.subr.bf16.mxu0 0
        %802 = vmatpush1.bf16.msra.mxu0 0
        %803 = vmatprep.mubr.bf16.mxu0 0
        %804 = vmatmul.mubr.bf16.gmra.mrb[0].mxu0 %v380
        %v805 = vpop.f32.mrb[0].mxu0
        %v806 = vadd.f32 %v449, %v805
        %v807 = vpop.f32.mrb[0].mxu0
        %v808 = vadd.f32 %v449, %v807
        %v809 = vpop.f32.mrb[0].mxu0
        %v810 = vpop.f32.mrb[0].mxu0
        %811 = vdwg.mxu0
        %812 = vmatprep.subr.bf16.mxu0 %v646
        %813 = vmatpush1.bf16.msra.mxu0 %v645
        %814 = vmatprep.subr.bf16.mxu0 %v654
        %815 = vmatpush1.bf16.msra.mxu0 %v653
        %816 = vmatprep.subr.bf16.mxu0 %v662
        %817 = vmatpush1.bf16.msra.mxu0 %v661
        %818 = vmatprep.subr.bf16.mxu0 %v670
        %819 = vmatpush1.bf16.msra.mxu0 %v669
        %820 = vmatprep.subr.bf16.mxu0 %v678
        %821 = vmatpush1.bf16.msra.mxu0 %v677
        %822 = vmatprep.subr.bf16.mxu0 %v686
        %823 = vmatpush1.bf16.msra.mxu0 %v685
        %824 = vmatprep.subr.bf16.mxu0 %v694
        %825 = vmatpush1.bf16.msra.mxu0 %v693
        %826 = vmatprep.subr.bf16.mxu0 %v702
        %827 = vmatpush1.bf16.msra.mxu0 %v701
        %828 = vmatprep.subr.bf16.mxu0 0
        %829 = vmatpush1.bf16.msra.mxu0 0
        %830 = vmatprep.subr.bf16.mxu0 0
        %831 = vmatpush1.bf16.msra.mxu0 0
        %832 = vmatprep.subr.bf16.mxu0 0
        %833 = vmatpush1.bf16.msra.mxu0 0
        %834 = vmatprep.subr.bf16.mxu0 0
        %835 = vmatpush1.bf16.msra.mxu0 0
        %836 = vmatprep.subr.bf16.mxu0 0
        %837 = vmatpush1.bf16.msra.mxu0 0
        %838 = vmatprep.subr.bf16.mxu0 0
        %839 = vmatpush1.bf16.msra.mxu0 0
        %840 = vmatprep.subr.bf16.mxu0 0
        %841 = vmatpush1.bf16.msra.mxu0 0
        %842 = vmatprep.subr.bf16.mxu0 0
        %843 = vmatpush1.bf16.msra.mxu0 0
        %844 = vmatprep.mubr.bf16.mxu0 0
        %845 = vmatmul.mubr.bf16.gmra.mrb[0].mxu0 %v380
        %v846 = vpop.f32.mrb[0].mxu0
        %v847 = vadd.f32 %v449, %v846
        %v848 = vpop.f32.mrb[0].mxu0
        %v849 = vadd.f32 %v449, %v848
        %v850 = vpop.f32.mrb[0].mxu0
        %v851 = vpop.f32.mrb[0].mxu0
        %852 = vdwg.mxu0
        %853 = vmatprep.subr.bf16.mxu0 %v648
        %854 = vmatpush1.bf16.msra.mxu0 %v647
        %855 = vmatprep.subr.bf16.mxu0 %v656
        %856 = vmatpush1.bf16.msra.mxu0 %v655
        %857 = vmatprep.subr.bf16.mxu0 %v664
        %858 = vmatpush1.bf16.msra.mxu0 %v663
        %859 = vmatprep.subr.bf16.mxu0 %v672
        %860 = vmatpush1.bf16.msra.mxu0 %v671
        %861 = vmatprep.subr.bf16.mxu0 %v680
        %862 = vmatpush1.bf16.msra.mxu0 %v679
        %863 = vmatprep.subr.bf16.mxu0 %v688
        %864 = vmatpush1.bf16.msra.mxu0 %v687
        %865 = vmatprep.subr.bf16.mxu0 %v696
        %866 = vmatpush1.bf16.msra.mxu0 %v695
        %867 = vmatprep.subr.bf16.mxu0 %v704
        %868 = vmatpush1.bf16.msra.mxu0 %v703
        %869 = vmatprep.subr.bf16.mxu0 0
        %870 = vmatpush1.bf16.msra.mxu0 0
        %871 = vmatprep.subr.bf16.mxu0 0
        %872 = vmatpush1.bf16.msra.mxu0 0
        %873 = vmatprep.subr.bf16.mxu0 0
        %874 = vmatpush1.bf16.msra.mxu0 0
        %875 = vmatprep.subr.bf16.mxu0 0
        %876 = vmatpush1.bf16.msra.mxu0 0
        %877 = vmatprep.subr.bf16.mxu0 0
        %878 = vmatpush1.bf16.msra.mxu0 0
        %879 = vmatprep.subr.bf16.mxu0 0
        %880 = vmatpush1.bf16.msra.mxu0 0
        %881 = vmatprep.subr.bf16.mxu0 0
        %882 = vmatpush1.bf16.msra.mxu0 0
        %883 = vmatprep.subr.bf16.mxu0 0
        %884 = vmatpush1.bf16.msra.mxu0 0
        %885 = vmatprep.mubr.bf16.mxu0 0
        %886 = vmatmul.mubr.bf16.gmra.mrb[0].mxu0 %v380
        %v887 = vpop.f32.mrb[0].mxu0
        %v888 = vadd.f32 %v449, %v887
        %v889 = vpop.f32.mrb[0].mxu0
        %v890 = vadd.f32 %v449, %v889
        %v891 = vpop.f32.mrb[0].mxu0
        %v892 = vpop.f32.mrb[0].mxu0
        %893 = vdwg.mxu0
        %894 = vmatprep.subr.bf16.mxu0 %v650
        %895 = vmatpush1.bf16.msra.mxu0 %v649
        %896 = vmatprep.subr.bf16.mxu0 %v658
        %897 = vmatpush1.bf16.msra.mxu0 %v657
        %898 = vmatprep.subr.bf16.mxu0 %v666
        %899 = vmatpush1.bf16.msra.mxu0 %v665
        %900 = vmatprep.subr.bf16.mxu0 %v674
        %901 = vmatpush1.bf16.msra.mxu0 %v673
        %902 = vmatprep.subr.bf16.mxu0 %v682
        %903 = vmatpush1.bf16.msra.mxu0 %v681
        %904 = vmatprep.subr.bf16.mxu0 %v690
        %905 = vmatpush1.bf16.msra.mxu0 %v689
        %906 = vmatprep.subr.bf16.mxu0 %v698
        %907 = vmatpush1.bf16.msra.mxu0 %v697
        %908 = vmatprep.subr.bf16.mxu0 %v706
        %909 = vmatpush1.bf16.msra.mxu0 %v705
        %910 = vmatprep.subr.bf16.mxu0 0
        %911 = vmatpush1.bf16.msra.mxu0 0
        %912 = vmatprep.subr.bf16.mxu0 0
        %913 = vmatpush1.bf16.msra.mxu0 0
        %914 = vmatprep.subr.bf16.mxu0 0
        %915 = vmatpush1.bf16.msra.mxu0 0
        %916 = vmatprep.subr.bf16.mxu0 0
        %917 = vmatpush1.bf16.msra.mxu0 0
        %918 = vmatprep.subr.bf16.mxu0 0
        %919 = vmatpush1.bf16.msra.mxu0 0
        %920 = vmatprep.subr.bf16.mxu0 0
        %921 = vmatpush1.bf16.msra.mxu0 0
        %922 = vmatprep.subr.bf16.mxu0 0
        %923 = vmatpush1.bf16.msra.mxu0 0
        %924 = vmatprep.subr.bf16.mxu0 0
        %925 = vmatpush1.bf16.msra.mxu0 0
        %926 = vmatprep.mubr.bf16.mxu0 0
        %927 = vmatmul.mubr.bf16.gmra.mrb[0].mxu0 %v380
        %v928 = vpop.f32.mrb[0].mxu0
        %v929 = vadd.f32 %v449, %v928
        %v930 = vpop.f32.mrb[0].mxu0
        %v931 = vadd.f32 %v449, %v930
        %v932 = vpop.f32.mrb[0].mxu0
        %v933 = vpop.f32.mrb[0].mxu0
        %934 = vdwg.mxu0
        %v935 = vmax.f32 %v806, 0.0
        %v936 = vmax.f32 %v808, 0.0
        %v937 = vmax.f32 %v847, 0.0
        %v938 = vmax.f32 %v849, 0.0
        %v939 = vmax.f32 %v888, 0.0
        %v940 = vmax.f32 %v890, 0.0
        %v941 = vmax.f32 %v929, 0.0
        %v942 = vmax.f32 %v931, 0.0
        %943 = vst [vmem:[%s377] sm:$0xff] %v935
        %944 = vst [vmem:[%s377 + $0x8] sm:$0xff] %v936
        %945 = vst [vmem:[%s377 + $0x10] sm:$0xff] %v937
        %946 = vst [vmem:[%s377 + $0x18] sm:$0xff] %v938
        %947 = vst [vmem:[%s377 + $0x20] sm:$0xff] %v939
        %948 = vst [vmem:[%s377 + $0x28] sm:$0xff] %v940
        %949 = vst [vmem:[%s377 + $0x30] sm:$0xff] %v941
        %950 = vst [vmem:[%s377 + $0x38] sm:$0xff] %v942
        %s951 = smul.u32 8, %s19
        %p952 = scmp.lt.s32.totalorder %s18, 0
        %s953 = scalar_select %p952, %s18, 0
        %p954 = scmp.lt.s32.totalorder %s951, 15
        %s955 = scalar_select %p954, %s951, 15
        %s956 = smul.addr %s953, 16
        %s957 = sadd.s32 %s955, %s956
        %s958 = smul.addr %s957, 8
        %s959 = scalar_lea.vmem %s3, %s958
        // Predicated region
        $region56: #{frac_encoder_forward.4} parent=50 // pred_check
          %p960 = pneg %p126
        $region57: #{frac_encoder_forward.4} parent=50 // pred_check_branch
          %962 = sbr.rel (%p960) target = $region59
        $region58: #{frac_encoder_forward.4} parent=50 // pred_region
          %s963 = smul.u32 8, %s19
        $region59: #{frac_encoder_forward.4} parent=50 // pred_fallthru
          _
      $region51: #{frac_encoder_forward.4} parent=5 // pred_fallthru
        _
      %p964 = scmp.le.s32.totalorder 2, %s9
      // Predicated region
      $region60: #{frac_encoder_forward.4} parent=5 // pred_check
        %p965 = pneg %p964
      $region61: #{frac_encoder_forward.4} parent=5 // pred_check_branch
        %967 = sbr.rel (%p965) target = $region63
      $region62: #{frac_encoder_forward.4} parent=5 // pred_region
        %s968 = ssub.s32 %s9, 2
        // Predicated region
        $region64: #{frac_encoder_forward.4} parent=62 // pred_check
          %p969 = pneg %p132
        $region65: #{frac_encoder_forward.4} parent=62 // pred_check_branch
          %971 = sbr.rel (%p969) target = $region67
        $region66: #{frac_encoder_forward.4} parent=62 // pred_region
          %s972 = smul.u32 8, %s21
          %p973 = scmp.lt.s32.totalorder %s20, 0
          %s974 = scalar_select %p973, %s20, 0
          %p975 = scmp.lt.s32.totalorder %s972, 15
          %s976 = scalar_select %p975, %s972, 15
          %s977 = smul.addr %s974, 16
          %s978 = sadd.s32 %s976, %s977
          %s979 = smul.addr %s978, 8
          %s980 = scalar_lea.vmem %s3, %s979
        $region67: #{frac_encoder_forward.4} parent=62 // pred_fallthru
          _
      $region63: #{frac_encoder_forward.4} parent=5 // pred_fallthru
        _
    $region6: #{frac_encoder_forward.4} parent=1 // loop_footer
      %s13 = sadd.s32 1, %s9
    $region7: #{frac_encoder_forward.4} parent=1 // loop_footer_branch
      %8 = sbr.rel target = $region3
    $region8: #{frac_encoder_forward.4} parent=1 // loop_exit
      _

// kernel: frac_encoder_forward.5
$region0: #{frac_encoder_forward.5}
  #allocation0 [shape = 'u32[]', space=smem, size = 0x4, offset = 0x4, fixed_abs, tag = 'smem constant byte address 0x4 - core index']
  #allocation1 [shape = 'u32[144,128]{1,0:T(1,128)}', space=vmem, size = 0x12000, scoped, tag = 'internal scratch']
  %s0 = inlined_call_operand.vmem [shape: bf16[1,8,128], index: 0, kind: input, shape index: {}]
  %s1 = inlined_call_operand.vmem [shape: bf16[1,128,512], index: 1, kind: input, shape index: {}]
  %s2 = inlined_call_operand.vmem [shape: f32[1,8,1], index: 2, kind: input, shape index: {}]
  %s3 = inlined_call_operand.vmem [shape: f32[1,8,512], index: 3, kind: output, shape index: {}]
  %s4 = sld [smem:[#allocation0]]
  $region83: #{frac_encoder_forward.5} parent=0
    _
  %s6 = ssub.s32 1, %s4
  %s7 = scalar_select 0, %s6, %s4
  $region1: #{frac_encoder_forward.5} parent=0
    #allocation2 [shape = 'u8[131072]{0}', space=vmem, size = 0x20000, scoped, tag = 'input window, operand 1']
    loop: start=0, step=1, limit=4
    $region2: #{frac_encoder_forward.5} parent=1 // loop_pre_header
      _
    $region3: #{frac_encoder_forward.5} parent=1 // loop_header
      %s9 = sphi 0, %s13
      %p10 = scmp.ge.s32.totalorder %s9, 4
      %s16 = sphi 0, %s28
      %s17 = sphi 0, %s24
      %s18 = sphi 0, %s16
      %s19 = sphi 0, %s17
      %s20 = sphi 0, %s18
      %s21 = sphi 0, %s19
      %s31 = sphi 0, %s33
      %s34 = sphi 0, %s31
      %s35 = sphi 0, %s34
      %s51 = sphi 0, %s35
      %s59 = sphi 0, %s61
      %s62 = sphi 0, %s59
      %s63 = sphi 0, %s62
      %s79 = sphi 0, %s63
      %s85 = sphi 0, %s87
      %s88 = sphi 0, %s85
      %s89 = sphi 0, %s88
      %s105 = sphi 0, %s89
      %s113 = sphi 0, %s115
      %s116 = sphi 0, %s113
      %s117 = sphi 0, %s116
      %s133 = sphi 0, %s117
    $region4: #{frac_encoder_forward.5} parent=1 // loop_header_branch
      %12 = sbr.rel (%p10) target = $region8
    $region5: #{frac_encoder_forward.5} parent=1 // loop_body
      %s14 = ssub.s32 %s9, 1
      %s15 = ssub.s32 %s9, 2
      %s22 = sadd.s32 1, %s17
      %p23 = scmp.ge.s32.totalorder %s22, 2
      %s24 = scalar_select %p23, 0, %s22
      %s25 = sadd.s32 1, %s16
      %s26 = scalar_select %p23, %s25, %s16
      %p27 = scmp.ge.s32.totalorder %s26, 1
      %s28 = scalar_select %p27, 0, %s26
      %s29 = ssub.s32 %s16, %s28
      %p30 = scmp.eq.s32.totalorder %s29, 0
      %s32 = sadd.s32 %s31, 1
      %s33 = scalar_select %p30, %s31, %s32
      %p36 = pneg %p30
      %p37 = scmp.eq.s32.totalorder %s9, 1
      %p38 = por %p36, %p37
      %p39 = scmp.ne.s32.totalorder %s31, %s34
      %p40 = scmp.eq.s32.totalorder %s9, 0
      %p41 = por %p39, %p40
      %p42 = scmp.ne.s32.totalorder %s31, %s34
      %p43 = scmp.eq.s32.totalorder %s14, 1
      %p44 = por %p42, %p43
      %p45 = scmp.ne.s32.totalorder %s34, %s35
      %p46 = scmp.eq.s32.totalorder %s14, 0
      %p47 = por %p45, %p46
      %p48 = scmp.ne.s32.totalorder %s34, %s35
      %p49 = scmp.eq.s32.totalorder %s15, 1
      %p50 = por %p48, %p49
      %p52 = scmp.ne.s32.totalorder %s35, %s51
      %p53 = scmp.eq.s32.totalorder %s15, 0
      %p54 = por %p52, %p53
      %s55 = ssub.s32 %s16, %s28
      %s56 = ssub.s32 %s17, %s24
      %s57 = sor.u32 %s55, %s56
      %p58 = scmp.eq.s32.totalorder %s57, 0
      %s60 = sadd.s32 %s59, 1
      %s61 = scalar_select %p58, %s59, %s60
      %p64 = pneg %p58
      %p65 = scmp.eq.s32.totalorder %s9, 1
      %p66 = por %p64, %p65
      %p67 = scmp.ne.s32.totalorder %s59, %s62
      %p68 = scmp.eq.s32.totalorder %s9, 0
      %p69 = por %p67, %p68
      %p70 = scmp.ne.s32.totalorder %s59, %s62
      %p71 = scmp.eq.s32.totalorder %s14, 1
      %p72 = por %p70, %p71
      %p73 = scmp.ne.s32.totalorder %s62, %s63
      %p74 = scmp.eq.s32.totalorder %s14, 0
      %p75 = por %p73, %p74
      %p76 = scmp.ne.s32.totalorder %s62, %s63
      %p77 = scmp.eq.s32.totalorder %s15, 1
      %p78 = por %p76, %p77
      %p80 = scmp.ne.s32.totalorder %s63, %s79
      %p81 = scmp.eq.s32.totalorder %s15, 0
      %p82 = por %p80, %p81
      %s83 = ssub.s32 %s16, %s28
      %p84 = scmp.eq.s32.totalorder %s83, 0
      %s86 = sadd.s32 %s85, 1
      %s87 = scalar_select %p84, %s85, %s86
      %p90 = pneg %p84
      %p91 = scmp.eq.s32.totalorder %s9, 1
      %p92 = por %p90, %p91
      %p93 = scmp.ne.s32.totalorder %s85, %s88
      %p94 = scmp.eq.s32.totalorder %s9, 0
      %p95 = por %p93, %p94
      %p96 = scmp.ne.s32.totalorder %s85, %s88
      %p97 = scmp.eq.s32.totalorder %s14, 1
      %p98 = por %p96, %p97
      %p99 = scmp.ne.s32.totalorder %s88, %s89
      %p100 = scmp.eq.s32.totalorder %s14, 0
      %p101 = por %p99, %p100
      %p102 = scmp.ne.s32.totalorder %s88, %s89
      %p103 = scmp.eq.s32.totalorder %s15, 1
      %p104 = por %p102, %p103
      %p106 = scmp.ne.s32.totalorder %s89, %s105
      %p107 = scmp.eq.s32.totalorder %s15, 0
      %p108 = por %p106, %p107
      %s109 = ssub.s32 %s16, %s28
      %s110 = ssub.s32 %s17, %s24
      %s111 = sor.u32 %s109, %s110
      %p112 = scmp.eq.s32.totalorder %s111, 0
      %s114 = sadd.s32 %s113, 1
      %s115 = scalar_select %p112, %s113, %s114
      %p118 = pneg %p112
      %p119 = scmp.eq.s32.totalorder %s9, 1
      %p120 = por %p118, %p119
      %p121 = scmp.ne.s32.totalorder %s113, %s116
      %p122 = scmp.eq.s32.totalorder %s9, 0
      %p123 = por %p121, %p122
      %p124 = scmp.ne.s32.totalorder %s113, %s116
      %p125 = scmp.eq.s32.totalorder %s14, 1
      %p126 = por %p124, %p125
      %p127 = scmp.ne.s32.totalorder %s116, %s117
      %p128 = scmp.eq.s32.totalorder %s14, 0
      %p129 = por %p127, %p128
      %p130 = scmp.ne.s32.totalorder %s116, %s117
      %p131 = scmp.eq.s32.totalorder %s15, 1
      %p132 = por %p130, %p131
      %p134 = scmp.ne.s32.totalorder %s117, %s133
      %p135 = scmp.eq.s32.totalorder %s15, 0
      %p136 = por %p134, %p135
      %p137 = scmp.le.s32.totalorder 1, %s9
      %p138 = scmp.lt.s32.totalorder %s9, 3
      %p139 = pnand %p137, %p138
      %p140 = pneg %p139
      // Predicated region
      $region9: #{frac_encoder_forward.5} parent=5 // pred_check
        _
      $region10: #{frac_encoder_forward.5} parent=5 // pred_check_branch
        %142 = sbr.rel (%p139) target = $region12
      $region11: #{frac_encoder_forward.5} parent=5 // pred_region
        %s143 = ssub.s32 %s9, 1
        // Predicated region
        $region13: #{frac_encoder_forward.5} parent=11 // pred_check
          %p144 = pneg %p47
        $region14: #{frac_encoder_forward.5} parent=11 // pred_check_branch
          %146 = sbr.rel (%p144) target = $region16
        $region15: #{frac_encoder_forward.5} parent=11 // pred_region
          %p147 = scmp.lt.s32.totalorder %s18, 0
          %s148 = scalar_select %p147, %s18, 0
          %s149 = smul.addr %s148, 4
          %s150 = scalar_lea.vmem %s0, %s149
        $region16: #{frac_encoder_forward.5} parent=11 // pred_fallthru
          _
        // Predicated region
        $region17: #{frac_encoder_forward.5} parent=11 // pred_check
          %p151 = pneg %p101
        $region18: #{frac_encoder_forward.5} parent=11 // pred_check_branch
          %153 = sbr.rel (%p151) target = $region20
        $region19: #{frac_encoder_forward.5} parent=11 // pred_region
          %p154 = scmp.lt.s32.totalorder %s18, 0
          %s155 = scalar_select %p154, %s18, 0
          %s156 = smul.addr %s155, 8
          %s157 = scalar_lea.vmem %s2, %s156
        $region20: #{frac_encoder_forward.5} parent=11 // pred_fallthru
          _
      $region12: #{frac_encoder_forward.5} parent=5 // pred_fallthru
        _
      %p158 = scmp.lt.s32.totalorder %s9, 2
      // Predicated region
      $region21: #{frac_encoder_forward.5} parent=5 // pred_check
        %p159 = pneg %p158
      $region22: #{frac_encoder_forward.5} parent=5 // pred_check_branch
        %161 = sbr.rel (%p159) target = $region24
      $region23: #{frac_encoder_forward.5} parent=5 // pred_region
        // Predicated region
        $region25: #{frac_encoder_forward.5} parent=23 // pred_check
          %p162 = pneg %p69
        $region26: #{frac_encoder_forward.5} parent=23 // pred_check_branch
          %164 = sbr.rel (%p162) target = $region28
        $region27: #{frac_encoder_forward.5} parent=23 // pred_region
          %s165 = sand.u32 %s59, 1
          %s166 = sand.u32 %s59, 1
          %s167 = smul.addr %s166, 128
          %s168 = scalar_lea.vmem [#allocation2], %s167
          %s169 = smul.u32 2, %s17
          %s170 = smul.addr %s16, 64
          %s171 = sadd.s32 %s169, %s170
          %s172 = smul.addr %s171, 4
          %s173 = scalar_lea.vmem %s1, %s172
          // Predicated region
          $region29: #{frac_encoder_forward.5} parent=27 // pred_check
            _
          $region30: #{frac_encoder_forward.5} parent=27 // pred_check_branch
            %175 = sbr.rel (0) target = $region32
          $region31: #{frac_encoder_forward.5} parent=27 // pred_region
            // Predicated region
            $region33: #{frac_encoder_forward.5} parent=31 // pred_check
              _
            $region34: #{frac_encoder_forward.5} parent=31 // pred_check_branch
              %177 = sbr.rel (0) target = $region36
            $region35: #{frac_encoder_forward.5} parent=31 // pred_region
              // Predicated region
              $region48: #{frac_encoder_forward.5} parent=35 // pred_check
                _
              $region49: #{frac_encoder_forward.5} parent=35 // pred_check_branch
                %222 = sbr.rel (0) target = $region51
              $region50: #{frac_encoder_forward.5} parent=35 // pred_region
                loop: start=0, step=1, limit=1
                $region52: #{frac_encoder_forward.5} parent=50 // loop_pre_header
                  _
                $region53: #{frac_encoder_forward.5} parent=50 // loop_header
                  %s224 = sphi 0, %s228
                  %p225 = scmp.ge.s32.totalorder %s224, 1
                  %s229 = sphi %s173, %s173
                  %s230 = sphi %s168, %s168
                $region54: #{frac_encoder_forward.5} parent=50 // loop_header_branch
                  %227 = sbr.rel (%p225) target = $region58
                $region55: #{frac_encoder_forward.5} parent=50 // loop_body
                  %v231 = vld [vmem:[%s229] sm:$0xff]
                  %232 = vst [vmem:[%s230] sm:$0xff] %v231
                  %v233 = vld [vmem:[%s229 + $0x10] sm:$0xff]
                  %234 = vst [vmem:[%s230 + $0x8] sm:$0xff] %v233
                  %v235 = vld [vmem:[%s229 + $0x20] sm:$0xff]
                  %236 = vst [vmem:[%s230 + $0x10] sm:$0xff] %v235
                  %v237 = vld [vmem:[%s229 + $0x30] sm:$0xff]
                  %238 = vst [vmem:[%s230 + $0x18] sm:$0xff] %v237
                  %v239 = vld [vmem:[%s229 + $0x40] sm:$0xff]
                  %240 = vst [vmem:[%s230 + $0x20] sm:$0xff] %v239
                  %v241 = vld [vmem:[%s229 + $0x50] sm:$0xff]
                  %242 = vst [vmem:[%s230 + $0x28] sm:$0xff] %v241
                  %v243 = vld [vmem:[%s229 + $0x60] sm:$0xff]
                  %244 = vst [vmem:[%s230 + $0x30] sm:$0xff] %v243
                  %v245 = vld [vmem:[%s229 + $0x70] sm:$0xff]
                  %246 = vst [vmem:[%s230 + $0x38] sm:$0xff] %v245
                  %v247 = vld [vmem:[%s229 + $0x80] sm:$0xff]
                  %248 = vst [vmem:[%s230 + $0x40] sm:$0xff] %v247
                  %v249 = vld [vmem:[%s229 + $0x90] sm:$0xff]
                  %250 = vst [vmem:[%s230 + $0x48] sm:$0xff] %v249
                  %v251 = vld [vmem:[%s229 + $0xa0] sm:$0xff]
                  %252 = vst [vmem:[%s230 + $0x50] sm:$0xff] %v251
                  %v253 = vld [vmem:[%s229 + $0xb0] sm:$0xff]
                  %254 = vst [vmem:[%s230 + $0x58] sm:$0xff] %v253
                  %v255 = vld [vmem:[%s229 + $0xc0] sm:$0xff]
                  %256 = vst [vmem:[%s230 + $0x60] sm:$0xff] %v255
                  %v257 = vld [vmem:[%s229 + $0xd0] sm:$0xff]
                  %258 = vst [vmem:[%s230 + $0x68] sm:$0xff] %v257
                  %v259 = vld [vmem:[%s229 + $0xe0] sm:$0xff]
                  %260 = vst [vmem:[%s230 + $0x70] sm:$0xff] %v259
                  %v261 = vld [vmem:[%s229 + $0xf0] sm:$0xff]
                  %262 = vst [vmem:[%s230 + $0x78] sm:$0xff] %v261
                $region56: #{frac_encoder_forward.5} parent=50 // loop_footer
                  %s228 = sadd.s32 1, %s224
                $region57: #{frac_encoder_forward.5} parent=50 // loop_footer_branch
                  %223 = sbr.rel target = $region53
                $region58: #{frac_encoder_forward.5} parent=50 // loop_exit
                  _
              $region51: #{frac_encoder_forward.5} parent=35 // pred_fallthru
                _
              // Predicated region
              $region59: #{frac_encoder_forward.5} parent=35 // pred_check
                _
              $region60: #{frac_encoder_forward.5} parent=35 // pred_check_branch
                %264 = sbr.rel target = $region62
              $region61: #{frac_encoder_forward.5} parent=35 // pred_region
                _
              $region62: #{frac_encoder_forward.5} parent=35 // pred_fallthru
                _
            $region36: #{frac_encoder_forward.5} parent=31 // pred_fallthru
              _
            // Predicated region
            $region37: #{frac_encoder_forward.5} parent=31 // pred_check
              _
            $region38: #{frac_encoder_forward.5} parent=31 // pred_check_branch
              %179 = sbr.rel target = $region40
            $region39: #{frac_encoder_forward.5} parent=31 // pred_region
              loop: start=0, step=1, limit=1
              $region41: #{frac_encoder_forward.5} parent=39 // loop_pre_header
                _
              $region42: #{frac_encoder_forward.5} parent=39 // loop_header
                %s182 = sphi 0, %s186
                %p183 = scmp.ge.s32.totalorder %s182, 1
                %s187 = sphi %s173, %s173
                %s188 = sphi %s168, %s168
              $region43: #{frac_encoder_forward.5} parent=39 // loop_header_branch
                %185 = sbr.rel (%p183) target = $region47
              $region44: #{frac_encoder_forward.5} parent=39 // loop_body
                %v189 = vld [vmem:[%s187] sm:$0xff]
                %190 = vst [vmem:[%s188] sm:$0xff] %v189
                %v191 = vld [vmem:[%s187 + $0x10] sm:$0xff]
                %192 = vst [vmem:[%s188 + $0x8] sm:$0xff] %v191
                %v193 = vld [vmem:[%s187 + $0x20] sm:$0xff]
                %194 = vst [vmem:[%s188 + $0x10] sm:$0xff] %v193
                %v195 = vld [vmem:[%s187 + $0x30] sm:$0xff]
                %196 = vst [vmem:[%s188 + $0x18] sm:$0xff] %v195
                %v197 = vld [vmem:[%s187 + $0x40] sm:$0xff]
                %198 = vst [vmem:[%s188 + $0x20] sm:$0xff] %v197
                %v199 = vld [vmem:[%s187 + $0x50] sm:$0xff]
                %200 = vst [vmem:[%s188 + $0x28] sm:$0xff] %v199
                %v201 = vld [vmem:[%s187 + $0x60] sm:$0xff]
                %202 = vst [vmem:[%s188 + $0x30] sm:$0xff] %v201
                %v203 = vld [vmem:[%s187 + $0x70] sm:$0xff]
                %204 = vst [vmem:[%s188 + $0x38] sm:$0xff] %v203
                %v205 = vld [vmem:[%s187 + $0x80] sm:$0xff]
                %206 = vst [vmem:[%s188 + $0x40] sm:$0xff] %v205
                %v207 = vld [vmem:[%s187 + $0x90] sm:$0xff]
                %208 = vst [vmem:[%s188 + $0x48] sm:$0xff] %v207
                %v209 = vld [vmem:[%s187 + $0xa0] sm:$0xff]
                %210 = vst [vmem:[%s188 + $0x50] sm:$0xff] %v209
                %v211 = vld [vmem:[%s187 + $0xb0] sm:$0xff]
                %212 = vst [vmem:[%s188 + $0x58] sm:$0xff] %v211
                %v213 = vld [vmem:[%s187 + $0xc0] sm:$0xff]
                %214 = vst [vmem:[%s188 + $0x60] sm:$0xff] %v213
                %v215 = vld [vmem:[%s187 + $0xd0] sm:$0xff]
                %216 = vst [vmem:[%s188 + $0x68] sm:$0xff] %v215
                %v217 = vld [vmem:[%s187 + $0xe0] sm:$0xff]
                %218 = vst [vmem:[%s188 + $0x70] sm:$0xff] %v217
                %v219 = vld [vmem:[%s187 + $0xf0] sm:$0xff]
                %220 = vst [vmem:[%s188 + $0x78] sm:$0xff] %v219
              $region45: #{frac_encoder_forward.5} parent=39 // loop_footer
                %s186 = sadd.s32 1, %s182
              $region46: #{frac_encoder_forward.5} parent=39 // loop_footer_branch
                %181 = sbr.rel target = $region42
              $region47: #{frac_encoder_forward.5} parent=39 // loop_exit
                _
            $region40: #{frac_encoder_forward.5} parent=31 // pred_fallthru
              _
          $region32: #{frac_encoder_forward.5} parent=27 // pred_fallthru
            _
          %265 = vnop
        $region28: #{frac_encoder_forward.5} parent=23 // pred_fallthru
          _
      $region24: #{frac_encoder_forward.5} parent=5 // pred_fallthru
        _
      %p266 = scmp.le.s32.totalorder 1, %s9
      %p267 = scmp.lt.s32.totalorder %s9, 3
      %p268 = pnand %p266, %p267
      %p269 = pneg %p268
      // Predicated region
      $region63: #{frac_encoder_forward.5} parent=5 // pred_check
        _
      $region64: #{frac_encoder_forward.5} parent=5 // pred_check_branch
        %271 = sbr.rel (%p268) target = $region66
      $region65: #{frac_encoder_forward.5} parent=5 // pred_region
        %s272 = ssub.s32 %s9, 1
        %s273 = sand.u32 %s62, 1
        %s274 = sand.u32 %s62, 1
        %s275 = smul.addr %s274, 128
        %s276 = scalar_lea.vmem [#allocation2], %s275
        // Predicated region
        $region67: #{frac_encoder_forward.5} parent=65 // pred_check
          %p277 = pneg %p75
        $region68: #{frac_encoder_forward.5} parent=65 // pred_check_branch
          %279 = sbr.rel (%p277) target = $region70
        $region69: #{frac_encoder_forward.5} parent=65 // pred_region
          _
        $region70: #{frac_encoder_forward.5} parent=65 // pred_fallthru
          _
        %p280 = scmp.lt.s32.totalorder %s18, 0
        %s281 = scalar_select %p280, %s18, 0
        %s282 = smul.addr %s281, 4
        %s283 = scalar_lea.vmem %s0, %s282
        %p284 = pneg %p47
        %p285 = pneg %p44
        %s286 = sand.u32 %s62, 1
        %s287 = sand.u32 %s62, 1
        %s288 = smul.addr %s287, 128
        %s289 = scalar_lea.vmem [#allocation2], %s288
        %p290 = pneg %p75
        %p291 = pneg %p72
        %p292 = scmp.lt.s32.totalorder %s18, 0
        %s293 = scalar_select %p292, %s18, 0
        %s294 = smul.addr %s293, 8
        %s295 = scalar_lea.vmem %s2, %s294
        %p296 = pneg %p101
        %p297 = pneg %p98
        %p298 = pneg %p129
        %p299 = pneg %p126
        %s300 = smul.u32 2, %s19
        %p301 = scmp.lt.s32.totalorder %s18, 0
        %s302 = scalar_select %p301, %s18, 0
        %p303 = scmp.lt.s32.totalorder %s300, 3
        %s304 = scalar_select %p303, %s300, 3
        %s305 = smul.addr %s302, 4
        %s306 = sadd.s32 %s304, %s305
        %s307 = smul.addr %s306, 8
        %s308 = scalar_lea.vmem %s3, %s307
        %p309 = scmp.lt.s32.totalorder %s18, 0
        %s310 = scalar_select %p309, %s18, 0
        %s311 = smul.addr %s310, 4
        %s312 = scalar_lea.vmem %s0, %s311
        %s313 = smul.u32 2, %s19
        %p314 = scmp.lt.s32.totalorder %s18, 0
        %s315 = scalar_select %p314, %s18, 0
        %s316 = smul.addr %s315, 8
        %s317 = scalar_lea.vmem %s2, %s316
        %s318 = smul.u32 2, %s19
        %p319 = scmp.lt.s32.totalorder %s18, 0
        %s320 = scalar_select %p319, %s18, 0
        %p321 = scmp.lt.s32.totalorder %s318, 3
        %s322 = scalar_select %p321, %s318, 3
        %s323 = smul.addr %s320, 4
        %s324 = sadd.s32 %s322, %s323
        %s325 = smul.addr %s324, 8
        %s326 = scalar_lea.vmem %s3, %s325
        %s327 = smul.u32 2, %s19
        %v329 = vld [vmem:[%s312] sm:$0xf]
        %v330 = vld [vmem:[%s276] sm:$0xff]
        %v331 = vld [vmem:[%s276 + $0x8] sm:$0xff]
        %v332 = vld [vmem:[%s276 + $0x10] sm:$0xff]
        %v333 = vld [vmem:[%s276 + $0x18] sm:$0xff]
        %v334 = vld [vmem:[%s276 + $0x20] sm:$0xff]
        %v335 = vld [vmem:[%s276 + $0x28] sm:$0xff]
        %v336 = vld [vmem:[%s276 + $0x30] sm:$0xff]
        %v337 = vld [vmem:[%s276 + $0x38] sm:$0xff]
        %v338 = vld [vmem:[%s276 + $0x40] sm:$0xff]
        %v339 = vld [vmem:[%s276 + $0x48] sm:$0xff]
        %v340 = vld [vmem:[%s276 + $0x50] sm:$0xff]
        %v341 = vld [vmem:[%s276 + $0x58] sm:$0xff]
        %v342 = vld [vmem:[%s276 + $0x60] sm:$0xff]
        %v343 = vld [vmem:[%s276 + $0x68] sm:$0xff]
        %v344 = vld [vmem:[%s276 + $0x70] sm:$0xff]
        %v345 = vld [vmem:[%s276 + $0x78] sm:$0xff]
        %v346 = vld [vmem:[%s317] sm:$0xff]
        %348 = vset.pattern.permute.xlu0 0
        %349 = vperm.xlu0 %348, %v346
        %v350 = vpop.permute.xlu0 %349
        %v368 = vunpack.c.l.b16 %v330
        %v369 = vunpack.c.h.b16 %v330
        %v370 = vunpack.c.l.b16 %v331
        %v371 = vunpack.c.h.b16 %v331
        %v372 = vunpack.c.l.b16 %v332
        %v373 = vunpack.c.h.b16 %v332
        %v374 = vunpack.c.l.b16 %v333
        %v375 = vunpack.c.h.b16 %v333
        %v376 = vunpack.c.l.b16 %v334
        %v377 = vunpack.c.h.b16 %v334
        %v378 = vunpack.c.l.b16 %v335
        %v379 = vunpack.c.h.b16 %v335
        %v380 = vunpack.c.l.b16 %v336
        %v381 = vunpack.c.h.b16 %v336
        %v382 = vunpack.c.l.b16 %v337
        %v383 = vunpack.c.h.b16 %v337
        %v384 = vunpack.c.l.b16 %v338
        %v385 = vunpack.c.h.b16 %v338
        %v386 = vunpack.c.l.b16 %v339
        %v387 = vunpack.c.h.b16 %v339
        %v388 = vunpack.c.l.b16 %v340
        %v389 = vunpack.c.h.b16 %v340
        %v390 = vunpack.c.l.b16 %v341
        %v391 = vunpack.c.h.b16 %v341
        %v392 = vunpack.c.l.b16 %v342
        %v393 = vunpack.c.h.b16 %v342
        %v394 = vunpack.c.l.b16 %v343
        %v395 = vunpack.c.h.b16 %v343
        %v396 = vunpack.c.l.b16 %v344
        %v397 = vunpack.c.h.b16 %v344
        %v398 = vunpack.c.l.b16 %v345
        %v399 = vunpack.c.h.b16 %v345
        %v400 = vpack.c.b16 %v370, %v368
        %v401 = vpack.c.b16 %v371, %v369
        %v402 = vpack.c.b16 %v374, %v372
        %v403 = vpack.c.b16 %v375, %v373
        %v404 = vpack.c.b16 %v378, %v376
        %v405 = vpack.c.b16 %v379, %v377
        %v406 = vpack.c.b16 %v382, %v380
        %v407 = vpack.c.b16 %v383, %v381
        %v408 = vpack.c.b16 %v386, %v384
        %v409 = vpack.c.b16 %v387, %v385
        %v410 = vpack.c.b16 %v390, %v388
        %v411 = vpack.c.b16 %v391, %v389
        %v412 = vpack.c.b16 %v394, %v392
        %v413 = vpack.c.b16 %v395, %v393
        %v414 = vpack.c.b16 %v398, %v396
        %v415 = vpack.c.b16 %v399, %v397
        %432 = vmatprep.subr.bf16.mxu0 %v401
        %433 = vmatpush1.bf16.msra.mxu0 %v400
        %434 = vmatprep.subr.bf16.mxu0 %v403
        %435 = vmatpush1.bf16.msra.mxu0 %v402
        %436 = vmatprep.subr.bf16.mxu0 %v405
        %437 = vmatpush1.bf16.msra.mxu0 %v404
        %438 = vmatprep.subr.bf16.mxu0 %v407
        %439 = vmatpush1.bf16.msra.mxu0 %v406
        %440 = vmatprep.subr.bf16.mxu0 %v409
        %441 = vmatpush1.bf16.msra.mxu0 %v408
        %442 = vmatprep.subr.bf16.mxu0 %v411
        %443 = vmatpush1.bf16.msra.mxu0 %v410
        %444 = vmatprep.subr.bf16.mxu0 %v413
        %445 = vmatpush1.bf16.msra.mxu0 %v412
        %446 = vmatprep.subr.bf16.mxu0 %v415
        %447 = vmatpush1.bf16.msra.mxu0 %v414
        %448 = vmatprep.subr.bf16.mxu0 0
        %449 = vmatpush1.bf16.msra.mxu0 0
        %450 = vmatprep.subr.bf16.mxu0 0
        %451 = vmatpush1.bf16.msra.mxu0 0
        %452 = vmatprep.subr.bf16.mxu0 0
        %453 = vmatpush1.bf16.msra.mxu0 0
        %454 = vmatprep.subr.bf16.mxu0 0
        %455 = vmatpush1.bf16.msra.mxu0 0
        %456 = vmatprep.subr.bf16.mxu0 0
        %457 = vmatpush1.bf16.msra.mxu0 0
        %458 = vmatprep.subr.bf16.mxu0 0
        %459 = vmatpush1.bf16.msra.mxu0 0
        %460 = vmatprep.subr.bf16.mxu0 0
        %461 = vmatpush1.bf16.msra.mxu0 0
        %462 = vmatprep.subr.bf16.mxu0 0
        %463 = vmatpush1.bf16.msra.mxu0 0
        %464 = vmatprep.mubr.bf16.mxu0 0
        %465 = vmatmul.mubr.bf16.gmra.mrb[0].mxu0 %v329
        %v466 = vpop.f32.mrb[0].mxu0
        %v467 = vadd.f32 %v350, %v466
        %v468 = vpop.f32.mrb[0].mxu0
        %v469 = vadd.f32 %v350, %v468
        %v470 = vpop.f32.mrb[0].mxu0
        %v471 = vpop.f32.mrb[0].mxu0
        %472 = vdwg.mxu0
        %v473 = vmax.f32 %v467, 0.0
        %v474 = vmax.f32 %v469, 0.0
        %475 = vst [vmem:[%s326] sm:$0xff] %v473
        %476 = vst [vmem:[%s326 + $0x8] sm:$0xff] %v474
        %s477 = smul.u32 2, %s19
        %p478 = scmp.lt.s32.totalorder %s18, 0
        %s479 = scalar_select %p478, %s18, 0
        %p480 = scmp.lt.s32.totalorder %s477, 3
        %s481 = scalar_select %p480, %s477, 3
        %s482 = smul.addr %s479, 4
        %s483 = sadd.s32 %s481, %s482
        %s484 = smul.addr %s483, 8
        %s485 = scalar_lea.vmem %s3, %s484
        // Predicated region
        $region71: #{frac_encoder_forward.5} parent=65 // pred_check
          %p486 = pneg %p126
        $region72: #{frac_encoder_forward.5} parent=65 // pred_check_branch
          %488 = sbr.rel (%p486) target = $region74
        $region73: #{frac_encoder_forward.5} parent=65 // pred_region
          %s489 = smul.u32 2, %s19
        $region74: #{frac_encoder_forward.5} parent=65 // pred_fallthru
          _
      $region66: #{frac_encoder_forward.5} parent=5 // pred_fallthru
        _
      %p490 = scmp.le.s32.totalorder 2, %s9
      // Predicated region
      $region75: #{frac_encoder_forward.5} parent=5 // pred_check
        %p491 = pneg %p490
      $region76: #{frac_encoder_forward.5} parent=5 // pred_check_branch
        %493 = sbr.rel (%p491) target = $region78
      $region77: #{frac_encoder_forward.5} parent=5 // pred_region
        %s494 = ssub.s32 %s9, 2
        // Predicated region
        $region79: #{frac_encoder_forward.5} parent=77 // pred_check
          %p495 = pneg %p132
        $region80: #{frac_encoder_forward.5} parent=77 // pred_check_branch
          %497 = sbr.rel (%p495) target = $region82
        $region81: #{frac_encoder_forward.5} parent=77 // pred_region
          %s498 = smul.u32 2, %s21
          %p499 = scmp.lt.s32.totalorder %s20, 0
          %s500 = scalar_select %p499, %s20, 0
          %p501 = scmp.lt.s32.totalorder %s498, 3
          %s502 = scalar_select %p501, %s498, 3
          %s503 = smul.addr %s500, 4
          %s504 = sadd.s32 %s502, %s503
          %s505 = smul.addr %s504, 8
          %s506 = scalar_lea.vmem %s3, %s505
        $region82: #{frac_encoder_forward.5} parent=77 // pred_fallthru
          _
      $region78: #{frac_encoder_forward.5} parent=5 // pred_fallthru
        _
    $region6: #{frac_encoder_forward.5} parent=1 // loop_footer
      %s13 = sadd.s32 1, %s9
    $region7: #{frac_encoder_forward.5} parent=1 // loop_footer_branch
      %8 = sbr.rel target = $region3
    $region8: #{frac_encoder_forward.5} parent=1 // loop_exit
      _

// kernel: frac_encoder_forward.6
$region0: #{frac_encoder_forward.6}
  #allocation0 [shape = 'u32[]', space=smem, size = 0x4, offset = 0x4, fixed_abs, tag = 'smem constant byte address 0x4 - core index']
  #allocation1 [shape = 'u32[144,128]{1,0:T(1,128)}', space=vmem, size = 0x12000, scoped, tag = 'internal scratch']
  %s0 = inlined_call_operand.vmem [shape: bf16[1,16,128], index: 0, kind: input, shape index: {}]
  %s1 = inlined_call_operand.vmem [shape: bf16[1,128,128], index: 1, kind: input, shape index: {}]
  %s2 = inlined_call_operand.vmem [shape: f32[1,16,1], index: 2, kind: input, shape index: {}]
  %s3 = inlined_call_operand.vmem [shape: f32[1,16,128], index: 3, kind: output, shape index: {}]
  %s4 = sld [smem:[#allocation0]]
  $region22: #{frac_encoder_forward.6} parent=0
    _
  %s6 = ssub.s32 1, %s4
  %s7 = scalar_select 0, %s6, %s4
  // Predicated region
  $region2: #{frac_encoder_forward.6} parent=0 // pred_check
    _
  $region3: #{frac_encoder_forward.6} parent=0 // pred_check_branch
    %9 = sbr.rel (0) target = $region5
  $region4: #{frac_encoder_forward.6} parent=0 // pred_region
    _
  $region5: #{frac_encoder_forward.6} parent=0 // pred_fallthru
    _
  // Predicated region
  $region6: #{frac_encoder_forward.6} parent=0 // pred_check
    _
  $region7: #{frac_encoder_forward.6} parent=0 // pred_check_branch
    %11 = sbr.rel (0) target = $region9
  $region8: #{frac_encoder_forward.6} parent=0 // pred_region
    _
  $region9: #{frac_encoder_forward.6} parent=0 // pred_fallthru
    _
  // Predicated region
  $region10: #{frac_encoder_forward.6} parent=0 // pred_check
    _
  $region11: #{frac_encoder_forward.6} parent=0 // pred_check_branch
    %13 = sbr.rel (0) target = $region13
  $region12: #{frac_encoder_forward.6} parent=0 // pred_region
    _
  $region13: #{frac_encoder_forward.6} parent=0 // pred_fallthru
    _
  %v15 = vld [vmem:[%s0] sm:$0xf]
  %v16 = vld [vmem:[%s0 + $0x4] sm:$0xf]
  %v17 = vld [vmem:[%s1] sm:$0xf]
  %v18 = vld [vmem:[%s1 + $0x4] sm:$0xf]
  %v19 = vld [vmem:[%s1 + $0x8] sm:$0xf]
  %v20 = vld [vmem:[%s1 + $0xc] sm:$0xf]
  %v21 = vld [vmem:[%s1 + $0x10] sm:$0xf]
  %v22 = vld [vmem:[%s1 + $0x14] sm:$0xf]
  %v23 = vld [vmem:[%s1 + $0x18] sm:$0xf]
  %v24 = vld [vmem:[%s1 + $0x1c] sm:$0xf]
  %v25 = vld [vmem:[%s1 + $0x20] sm:$0xf]
  %v26 = vld [vmem:[%s1 + $0x24] sm:$0xf]
  %v27 = vld [vmem:[%s1 + $0x28] sm:$0xf]
  %v28 = vld [vmem:[%s1 + $0x2c] sm:$0xf]
  %v29 = vld [vmem:[%s1 + $0x30] sm:$0xf]
  %v30 = vld [vmem:[%s1 + $0x34] sm:$0xf]
  %v31 = vld [vmem:[%s1 + $0x38] sm:$0xf]
  %v32 = vld [vmem:[%s1 + $0x3c] sm:$0xf]
  %v33 = vld [vmem:[%s2] sm:$0xff]
  %v34 = vld [vmem:[%s2 + $0x8] sm:$0xff]
  %36 = vset.pattern.permute.xlu0 0
  %37 = vperm.xlu0 %36, %v33
  %v38 = vpop.permute.xlu0 %37
  %41 = vset.pattern.permute.xlu0 0
  %42 = vperm.xlu0 %41, %v34
  %v43 = vpop.permute.xlu0 %42
  %v47 = vunpack.c.l.b16 %v15
  %v48 = vunpack.c.l.b16 %v16
  %v49 = vpack.c.b16 %v48, %v47
  %v67 = vunpack.c.l.b16 %v17
  %v68 = vunpack.c.l.b16 %v18
  %v69 = vunpack.c.l.b16 %v19
  %v70 = vunpack.c.l.b16 %v20
  %v71 = vunpack.c.l.b16 %v21
  %v72 = vunpack.c.l.b16 %v22
  %v73 = vunpack.c.l.b16 %v23
  %v74 = vunpack.c.l.b16 %v24
  %v75 = vunpack.c.l.b16 %v25
  %v76 = vunpack.c.l.b16 %v26
  %v77 = vunpack.c.l.b16 %v27
  %v78 = vunpack.c.l.b16 %v28
  %v79 = vunpack.c.l.b16 %v29
  %v80 = vunpack.c.l.b16 %v30
  %v81 = vunpack.c.l.b16 %v31
  %v82 = vunpack.c.l.b16 %v32
  %v83 = vpack.c.b16 %v68, %v67
  %v84 = vpack.c.b16 %v70, %v69
  %v85 = vpack.c.b16 %v72, %v71
  %v86 = vpack.c.b16 %v74, %v73
  %v87 = vpack.c.b16 %v76, %v75
  %v88 = vpack.c.b16 %v78, %v77
  %v89 = vpack.c.b16 %v80, %v79
  %v90 = vpack.c.b16 %v82, %v81
  %99 = vmatprep.subr.bf16.mxu0 0
  %100 = vmatpush1.bf16.msra.mxu0 %v83
  %101 = vmatprep.subr.bf16.mxu0 0
  %102 = vmatpush1.bf16.msra.mxu0 %v84
  %103 = vmatprep.subr.bf16.mxu0 0
  %104 = vmatpush1.bf16.msra.mxu0 %v85
  %105 = vmatprep.subr.bf16.mxu0 0
  %106 = vmatpush1.bf16.msra.mxu0 %v86
  %107 = vmatprep.subr.bf16.mxu0 0
  %108 = vmatpush1.bf16.msra.mxu0 %v87
  %109 = vmatprep.subr.bf16.mxu0 0
  %110 = vmatpush1.bf16.msra.mxu0 %v88
  %111 = vmatprep.subr.bf16.mxu0 0
  %112 = vmatpush1.bf16.msra.mxu0 %v89
  %113 = vmatprep.subr.bf16.mxu0 0
  %114 = vmatpush1.bf16.msra.mxu0 %v90
  %115 = vmatprep.subr.bf16.mxu0 0
  %116 = vmatpush1.bf16.msra.mxu0 0
  %117 = vmatprep.subr.bf16.mxu0 0
  %118 = vmatpush1.bf16.msra.mxu0 0
  %119 = vmatprep.subr.bf16.mxu0 0
  %120 = vmatpush1.bf16.msra.mxu0 0
  %121 = vmatprep.subr.bf16.mxu0 0
  %122 = vmatpush1.bf16.msra.mxu0 0
  %123 = vmatprep.subr.bf16.mxu0 0
  %124 = vmatpush1.bf16.msra.mxu0 0
  %125 = vmatprep.subr.bf16.mxu0 0
  %126 = vmatpush1.bf16.msra.mxu0 0
  %127 = vmatprep.subr.bf16.mxu0 0
  %128 = vmatpush1.bf16.msra.mxu0 0
  %129 = vmatprep.subr.bf16.mxu0 0
  %130 = vmatpush1.bf16.msra.mxu0 0
  %131 = vmatprep.mubr.bf16.mxu0 0
  %132 = vmatmul.mubr.bf16.gmra.mrb[0].mxu0 %v49
  %v133 = vpop.f32.mrb[0].mxu0
  %v134 = vadd.f32 %v38, %v133
  %v135 = vpop.f32.mrb[0].mxu0
  %v136 = vpop.f32.mrb[0].mxu0
  %v137 = vadd.f32 %v43, %v136
  %v138 = vpop.f32.mrb[0].mxu0
  %139 = vdwg.mxu0
  %v140 = vmax.f32 %v134, 0.0
  %v141 = vmax.f32 %v137, 0.0
  %142 = vst [vmem:[%s3] sm:$0xff] %v140
  %143 = vst [vmem:[%s3 + $0x8] sm:$0xff] %v141
  // Predicated region
  $region14: #{frac_encoder_forward.6} parent=0 // pred_check
    _
  $region15: #{frac_encoder_forward.6} parent=0 // pred_check_branch
    %145 = sbr.rel (0) target = $region17
  $region16: #{frac_encoder_forward.6} parent=0 // pred_region
    _
  $region17: #{frac_encoder_forward.6} parent=0 // pred_fallthru
    _
  // Predicated region
  $region18: #{frac_encoder_forward.6} parent=0 // pred_check
    _
  $region19: #{frac_encoder_forward.6} parent=0 // pred_check_branch
    %147 = sbr.rel (0) target = $region21
  $region20: #{frac_encoder_forward.6} parent=0 // pred_region
    _
  $region21: #{frac_encoder_forward.6} parent=0 // pred_fallthru
    _

// kernel: frac_encoder_forward.7
$region0: #{frac_encoder_forward.7}
  #allocation0 [shape = 'u32[]', space=smem, size = 0x4, offset = 0x4, fixed_abs, tag = 'smem constant byte address 0x4 - core index']
  #allocation1 [shape = 'u32[144,128]{1,0:T(1,128)}', space=vmem, size = 0x12000, scoped, tag = 'internal scratch']
  %s0 = inlined_call_operand.vmem [shape: bf16[1,16,256], index: 0, kind: input, shape index: {}]
  %s1 = inlined_call_operand.vmem [shape: bf16[1,256,128], index: 1, kind: input, shape index: {}]
  %s2 = inlined_call_operand.vmem [shape: f32[1,16,1], index: 2, kind: input, shape index: {}]
  %s3 = inlined_call_operand.vmem [shape: f32[1,16,128], index: 3, kind: output, shape index: {}]
  %s4 = sld [smem:[#allocation0]]
  $region22: #{frac_encoder_forward.7} parent=0
    _
  %s6 = ssub.s32 1, %s4
  %s7 = scalar_select 0, %s6, %s4
  // Predicated region
  $region2: #{frac_encoder_forward.7} parent=0 // pred_check
    _
  $region3: #{frac_encoder_forward.7} parent=0 // pred_check_branch
    %9 = sbr.rel (0) target = $region5
  $region4: #{frac_encoder_forward.7} parent=0 // pred_region
    _
  $region5: #{frac_encoder_forward.7} parent=0 // pred_fallthru
    _
  // Predicated region
  $region6: #{frac_encoder_forward.7} parent=0 // pred_check
    _
  $region7: #{frac_encoder_forward.7} parent=0 // pred_check_branch
    %11 = sbr.rel (0) target = $region9
  $region8: #{frac_encoder_forward.7} parent=0 // pred_region
    _
  $region9: #{frac_encoder_forward.7} parent=0 // pred_fallthru
    _
  // Predicated region
  $region10: #{frac_encoder_forward.7} parent=0 // pred_check
    _
  $region11: #{frac_encoder_forward.7} parent=0 // pred_check_branch
    %13 = sbr.rel (0) target = $region13
  $region12: #{frac_encoder_forward.7} parent=0 // pred_region
    _
  $region13: #{frac_encoder_forward.7} parent=0 // pred_fallthru
    _
  %v15 = vld [vmem:[%s0] sm:$0xff]
  %v16 = vld [vmem:[%s0 + $0x8] sm:$0xff]
  %v17 = vld [vmem:[%s1] sm:$0xf]
  %v18 = vld [vmem:[%s1 + $0x4] sm:$0xf]
  %v19 = vld [vmem:[%s1 + $0x8] sm:$0xf]
  %v20 = vld [vmem:[%s1 + $0xc] sm:$0xf]
  %v21 = vld [vmem:[%s1 + $0x10] sm:$0xf]
  %v22 = vld [vmem:[%s1 + $0x14] sm:$0xf]
  %v23 = vld [vmem:[%s1 + $0x18] sm:$0xf]
  %v24 = vld [vmem:[%s1 + $0x1c] sm:$0xf]
  %v25 = vld [vmem:[%s1 + $0x20] sm:$0xf]
  %v26 = vld [vmem:[%s1 + $0x24] sm:$0xf]
  %v27 = vld [vmem:[%s1 + $0x28] sm:$0xf]
  %v28 = vld [vmem:[%s1 + $0x2c] sm:$0xf]
  %v29 = vld [vmem:[%s1 + $0x30] sm:$0xf]
  %v30 = vld [vmem:[%s1 + $0x34] sm:$0xf]
  %v31 = vld [vmem:[%s1 + $0x38] sm:$0xf]
  %v32 = vld [vmem:[%s1 + $0x3c] sm:$0xf]
  %v33 = vld [vmem:[%s1 + $0x40] sm:$0xf]
  %v34 = vld [vmem:[%s1 + $0x44] sm:$0xf]
  %v35 = vld [vmem:[%s1 + $0x48] sm:$0xf]
  %v36 = vld [vmem:[%s1 + $0x4c] sm:$0xf]
  %v37 = vld [vmem:[%s1 + $0x50] sm:$0xf]
  %v38 = vld [vmem:[%s1 + $0x54] sm:$0xf]
  %v39 = vld [vmem:[%s1 + $0x58] sm:$0xf]
  %v40 = vld [vmem:[%s1 + $0x5c] sm:$0xf]
  %v41 = vld [vmem:[%s1 + $0x60] sm:$0xf]
  %v42 = vld [vmem:[%s1 + $0x64] sm:$0xf]
  %v43 = vld [vmem:[%s1 + $0x68] sm:$0xf]
  %v44 = vld [vmem:[%s1 + $0x6c] sm:$0xf]
  %v45 = vld [vmem:[%s1 + $0x70] sm:$0xf]
  %v46 = vld [vmem:[%s1 + $0x74] sm:$0xf]
  %v47 = vld [vmem:[%s1 + $0x78] sm:$0xf]
  %v48 = vld [vmem:[%s1 + $0x7c] sm:$0xf]
  %v49 = vld [vmem:[%s2] sm:$0xff]
  %v50 = vld [vmem:[%s2 + $0x8] sm:$0xff]
  %52 = vset.pattern.permute.xlu0 0
  %53 = vperm.xlu0 %52, %v49
  %v54 = vpop.permute.xlu0 %53
  %57 = vset.pattern.permute.xlu0 0
  %58 = vperm.xlu0 %57, %v50
  %v59 = vpop.permute.xlu0 %58
  %v63 = vunpack.c.l.b16 %v15
  %v64 = vunpack.c.h.b16 %v15
  %v65 = vunpack.c.l.b16 %v16
  %v66 = vunpack.c.h.b16 %v16
  %v67 = vpack.c.b16 %v65, %v63
  %v68 = vpack.c.b16 %v66, %v64
  %v103 = vunpack.c.l.b16 %v17
  %v104 = vunpack.c.l.b16 %v18
  %v105 = vunpack.c.l.b16 %v19
  %v106 = vunpack.c.l.b16 %v20
  %v107 = vunpack.c.l.b16 %v21
  %v108 = vunpack.c.l.b16 %v22
  %v109 = vunpack.c.l.b16 %v23
  %v110 = vunpack.c.l.b16 %v24
  %v111 = vunpack.c.l.b16 %v25
  %v112 = vunpack.c.l.b16 %v26
  %v113 = vunpack.c.l.b16 %v27
  %v114 = vunpack.c.l.b16 %v28
  %v115 = vunpack.c.l.b16 %v29
  %v116 = vunpack.c.l.b16 %v30
  %v117 = vunpack.c.l.b16 %v31
  %v118 = vunpack.c.l.b16 %v32
  %v119 = vunpack.c.l.b16 %v33
  %v120 = vunpack.c.l.b16 %v34
  %v121 = vunpack.c.l.b16 %v35
  %v122 = vunpack.c.l.b16 %v36
  %v123 = vunpack.c.l.b16 %v37
  %v124 = vunpack.c.l.b16 %v38
  %v125 = vunpack.c.l.b16 %v39
  %v126 = vunpack.c.l.b16 %v40
  %v127 = vunpack.c.l.b16 %v41
  %v128 = vunpack.c.l.b16 %v42
  %v129 = vunpack.c.l.b16 %v43
  %v130 = vunpack.c.l.b16 %v44
  %v131 = vunpack.c.l.b16 %v45
  %v132 = vunpack.c.l.b16 %v46
  %v133 = vunpack.c.l.b16 %v47
  %v134 = vunpack.c.l.b16 %v48
  %v135 = vpack.c.b16 %v104, %v103
  %v136 = vpack.c.b16 %v106, %v105
  %v137 = vpack.c.b16 %v108, %v107
  %v138 = vpack.c.b16 %v110, %v109
  %v139 = vpack.c.b16 %v112, %v111
  %v140 = vpack.c.b16 %v114, %v113
  %v141 = vpack.c.b16 %v116, %v115
  %v142 = vpack.c.b16 %v118, %v117
  %v143 = vpack.c.b16 %v120, %v119
  %v144 = vpack.c.b16 %v122, %v121
  %v145 = vpack.c.b16 %v124, %v123
  %v146 = vpack.c.b16 %v126, %v125
  %v147 = vpack.c.b16 %v128, %v127
  %v148 = vpack.c.b16 %v130, %v129
  %v149 = vpack.c.b16 %v132, %v131
  %v150 = vpack.c.b16 %v134, %v133
  %167 = vmatprep.subr.bf16.mxu0 0
  %168 = vmatpush1.bf16.msra.mxu0 %v135
  %169 = vmatprep.subr.bf16.mxu0 0
  %170 = vmatpush1.bf16.msra.mxu0 %v136
  %171 = vmatprep.subr.bf16.mxu0 0
  %172 = vmatpush1.bf16.msra.mxu0 %v137
  %173 = vmatprep.subr.bf16.mxu0 0
  %174 = vmatpush1.bf16.msra.mxu0 %v138
  %175 = vmatprep.subr.bf16.mxu0 0
  %176 = vmatpush1.bf16.msra.mxu0 %v139
  %177 = vmatprep.subr.bf16.mxu0 0
  %178 = vmatpush1.bf16.msra.mxu0 %v140
  %179 = vmatprep.subr.bf16.mxu0 0
  %180 = vmatpush1.bf16.msra.mxu0 %v141
  %181 = vmatprep.subr.bf16.mxu0 0
  %182 = vmatpush1.bf16.msra.mxu0 %v142
  %183 = vmatprep.subr.bf16.mxu0 0
  %184 = vmatpush1.bf16.msra.mxu0 %v143
  %185 = vmatprep.subr.bf16.mxu0 0
  %186 = vmatpush1.bf16.msra.mxu0 %v144
  %187 = vmatprep.subr.bf16.mxu0 0
  %188 = vmatpush1.bf16.msra.mxu0 %v145
  %189 = vmatprep.subr.bf16.mxu0 0
  %190 = vmatpush1.bf16.msra.mxu0 %v146
  %191 = vmatprep.subr.bf16.mxu0 0
  %192 = vmatpush1.bf16.msra.mxu0 %v147
  %193 = vmatprep.subr.bf16.mxu0 0
  %194 = vmatpush1.bf16.msra.mxu0 %v148
  %195 = vmatprep.subr.bf16.mxu0 0
  %196 = vmatpush1.bf16.msra.mxu0 %v149
  %197 = vmatprep.subr.bf16.mxu0 0
  %198 = vmatpush1.bf16.msra.mxu0 %v150
  %199 = vmatprep.mubr.bf16.mxu0 %v68
  %200 = vmatmul.mubr.bf16.gmra.mrb[0].mxu0 %v67
  %v201 = vpop.f32.mrb[0].mxu0
  %v202 = vadd.f32 %v54, %v201
  %v203 = vpop.f32.mrb[0].mxu0
  %v204 = vpop.f32.mrb[0].mxu0
  %v205 = vadd.f32 %v59, %v204
  %v206 = vpop.f32.mrb[0].mxu0
  %207 = vdwg.mxu0
  %v208 = vmax.f32 %v202, 0.0
  %v209 = vmax.f32 %v205, 0.0
  %210 = vst [vmem:[%s3] sm:$0xff] %v208
  %211 = vst [vmem:[%s3 + $0x8] sm:$0xff] %v209
  // Predicated region
  $region14: #{frac_encoder_forward.7} parent=0 // pred_check
    _
  $region15: #{frac_encoder_forward.7} parent=0 // pred_check_branch
    %213 = sbr.rel (0) target = $region17
  $region16: #{frac_encoder_forward.7} parent=0 // pred_region
    _
  $region17: #{frac_encoder_forward.7} parent=0 // pred_fallthru
    _
  // Predicated region
  $region18: #{frac_encoder_forward.7} parent=0 // pred_check
    _
  $region19: #{frac_encoder_forward.7} parent=0 // pred_check_branch
    %215 = sbr.rel (0) target = $region21
  $region20: #{frac_encoder_forward.7} parent=0 // pred_region
    _
  $region21: #{frac_encoder_forward.7} parent=0 // pred_fallthru
    _

</llo_original>
